<compile_context>
chip_gen: v6e
topology: v6e:2x2x1
jax: 0.10.0
libtpu: 0.0.40
codegen_flags: <defaults>
</compile_context>

<pallas_src>
import math
import functools

import jax
import jax.numpy as jnp
from jax.experimental import pallas as pl
from jax.experimental.pallas import tpu as pltpu


def _layer_norm(x, w, b, eps=1e-5):
    mu = jnp.mean(x, axis=-1, keepdims=True)
    var = jnp.mean((x - mu) ** 2, axis=-1, keepdims=True)
    return (x - mu) * jax.lax.rsqrt(var + eps) * w + b


def _suffix_sum_exclusive(x):
    """out[..., j] = sum_{k > j} x[..., k]  (== disttotal - inclusive cumsum).

    Log-step (Hillis-Steele) scan: O(S log S) VPU/XLU work instead of an
    (S,S)x(S,S) MXU matmul against a dense triangular matrix.
    """
    s = x.shape[-1]
    acc = x
    d = 1
    while d < s:
        pad = jnp.zeros(acc.shape[:-1] + (d,), acc.dtype)
        acc = acc + jnp.concatenate([acc[..., d:], pad], axis=-1)
        d *= 2
    return acc - x


def transformer_layer_kernel(
    q_ref, k_ref, v_ref,
    wq_ref, bq_ref, wk_ref, bk_ref, wv_ref, bv_ref, wo_ref, bo_ref,
    gam_ref, ln1w_ref, ln1b_ref, w1_ref, b1_ref, w2_ref, b2_ref,
    ln2w_ref, ln2b_ref,
    out_ref,
    *, n_heads, mask_k, apply_pos, compute_dtype, approx_recip):
    TQ = q_ref.shape[1]
    S = k_ref.shape[1]
    D = q_ref.shape[2]
    H = n_heads
    dk = D // H
    cdt = compute_dtype

    q_start = pl.program_id(1) * TQ

    xq = q_ref[0]            # (TQ, D) f32
    xk = k_ref[0]            # (S, D)  f32
    xv = v_ref[0]            # (S, D)  f32

    # --- full-width projections: one (.,D)x(D,D) MXU matmul each (bf16 in / f32 acc)
    # TODO(synk): when kq_same and query is key the k projection could reuse q's.
    q2 = jnp.dot(xq.astype(cdt), wq_ref[...],
                 preferred_element_type=jnp.float32) + bq_ref[...]
    k2 = jnp.dot(xk.astype(cdt), wk_ref[...],
                 preferred_element_type=jnp.float32) + bk_ref[...]
    v2 = jnp.dot(xv.astype(cdt), wv_ref[...],
                 preferred_element_type=jnp.float32) + bv_ref[...]

    # fold the 1/sqrt(d_k) score scale into q (TQ*D elems instead of H*TQ*S)
    q2 = q2 * jnp.float32(1.0 / math.sqrt(dk))

    # --- split into head-major (H, ., dk) ONCE (pure layout), then batch all heads
    qh = jnp.stack([q2[:, h * dk:(h + 1) * dk] for h in range(H)], axis=0)  # (H,TQ,dk)
    kh = jnp.stack([k2[:, h * dk:(h + 1) * dk] for h in range(H)], axis=0)  # (H,S,dk)
    vh = jnp.stack([v2[:, h * dk:(h + 1) * dk] for h in range(H)], axis=0)  # (H,S,dk)

    # --- attention scores for all heads in one batched MXU op
    scores = jnp.einsum('hqd,hkd->hqk', qh.astype(cdt), kh.astype(cdt),
                        preferred_element_type=jnp.float32)                 # (H,TQ,S)

    # --- mask / distance geometry (computed once per tile, shared by all heads)
    row = jax.lax.broadcasted_iota(jnp.int32, (TQ, S), 0) + q_start
    col = jax.lax.broadcasted_iota(jnp.int32, (TQ, S), 1)
    src_mask = (col - row) < mask_k                 # True = visible
    mask_f = src_mask.astype(jnp.float32)
    pos_effect = jnp.abs(col - row).astype(jnp.float32)
    neg_big = jnp.float32(-1e32)

    # --- "no-grad" distance statistics: masked softmax + reverse cumulative sum
    s1 = jnp.where(src_mask, scores, neg_big)
    m1 = jnp.max(s1, axis=-1, keepdims=True)
    e1 = jnp.exp(s1 - m1)
    d1 = jnp.sum(e1, axis=-1, keepdims=True)
    if approx_recip:
        sm = e1 * pl.reciprocal(d1, approx=True)
    else:
        sm = e1 / d1
    sm = sm * mask_f
    rsum = _suffix_sum_exclusive(sm)                # == disttotal - cumsum(sm)
    dist_scores = jnp.sqrt(jnp.maximum(rsum * pos_effect, 0.0))

    neg_gamma = -jnp.log(1.0 + jnp.exp(gam_ref[...]))          # (H,1,1), -softplus
    total_effect = jnp.clip(jnp.exp(dist_scores * neg_gamma), 1e-5, 1e5)

    # --- final softmax
    s2 = jnp.where(src_mask, scores * total_effect, neg_big)
    m2 = jnp.max(s2, axis=-1, keepdims=True)
    e2 = jnp.exp(s2 - m2)
    d2 = jnp.sum(e2, axis=-1, keepdims=True)
    if approx_recip:
        probs = e2 * pl.reciprocal(d2, approx=True)
    else:
        probs = e2 / d2
    if mask_k == 0:
        # zero_pad: zero the attention row of the very first query position
        probs = jnp.where(row == 0, 0.0, probs)
    # TODO(synk): attention dropout omitted (identity / eval mode).

    # --- P @ V for all heads in one batched MXU op, then ONE full-width out-proj
    oh = jnp.einsum('hqk,hkd->hqd', probs.astype(cdt), vh.astype(cdt),
                    preferred_element_type=jnp.float32)                    # (H,TQ,dk)
    concat = jnp.concatenate([oh[h] for h in range(H)], axis=-1)           # (TQ, D)
    attn = jnp.dot(concat.astype(cdt), wo_ref[...],
                   preferred_element_type=jnp.float32) + bo_ref[...]       # (TQ, D)

    # --- residual + layer norms + FFN (dropouts are identity / eval mode)
    x = xq + attn
    x = _layer_norm(x, ln1w_ref[...], ln1b_ref[...])
    if apply_pos:
        h1 = jnp.dot(x.astype(cdt), w1_ref[...],
                     preferred_element_type=jnp.float32) + b1_ref[...]
        h1 = jnp.maximum(h1, 0.0)
        h2 = jnp.dot(h1.astype(cdt), w2_ref[...],
                     preferred_element_type=jnp.float32) + b2_ref[...]
        x = _layer_norm(x + h2, ln2w_ref[...], ln2b_ref[...])

    out_ref[0] = x.astype(out_ref.dtype)


def transformer_layer(query, key, values, p, *, mask, n_heads, apply_pos=True,
                      compute_dtype=jnp.bfloat16, q_tile=128):
    B, S, D = query.shape
    assert D % n_heads == 0
    d_ff = p['w1'].shape[1]

    tq = S if S <= q_tile else q_tile
    assert S % tq == 0, "sequence length must be divisible by the query tile"
    n_q = S // tq

    cdt = jnp.dtype(compute_dtype)
    approx_recip = (cdt != jnp.dtype(jnp.float32))

    def wcast(a):
        return a.astype(cdt)

    act_q_spec = pl.BlockSpec((1, tq, D), lambda b, qi: (b, qi, 0))
    act_kv_spec = pl.BlockSpec((1, S, D), lambda b, qi: (b, 0, 0))

    def full_spec(shape):
        return pl.BlockSpec(shape, lambda b, qi, _n=len(shape): (0,) * _n)

    in_specs = [
        act_q_spec, act_kv_spec, act_kv_spec,
        full_spec((D, D)), full_spec((1, D)),        # wq, bq
        full_spec((D, D)), full_spec((1, D)),        # wk, bk
        full_spec((D, D)), full_spec((1, D)),        # wv, bv
        full_spec((D, D)), full_spec((1, D)),        # wo, bo
        full_spec((n_heads, 1, 1)),                  # gammas
        full_spec((1, D)), full_spec((1, D)),        # ln1 w, b
        full_spec((D, d_ff)), full_spec((1, d_ff)),  # linear1
        full_spec((d_ff, D)), full_spec((1, D)),     # linear2
        full_spec((1, D)), full_spec((1, D)),        # ln2 w, b
    ]

    kernel = functools.partial(
        transformer_layer_kernel, n_heads=n_heads, mask_k=mask,
        apply_pos=apply_pos, compute_dtype=cdt, approx_recip=approx_recip)

    return pl.pallas_call(
        kernel,
        out_shape=jax.ShapeDtypeStruct((B, S, D), jnp.float32),
        grid=(B, n_q),
        in_specs=in_specs,
        out_specs=act_q_spec,
        compiler_params=pltpu.CompilerParams(
            dimension_semantics=("parallel", "parallel"),
            vmem_limit_bytes=64 * 1024 * 1024),
    )(query, key, values,
      wcast(p['wq']), p['bq'], wcast(p['wk']), p['bk'],
      wcast(p['wv']), p['bv'], wcast(p['wo']), p['bo'],
      p['gammas'], p['ln1_w'], p['ln1_b'],
      wcast(p['w1']), p['b1'], wcast(p['w2']), p['b2'],
      p['ln2_w'], p['ln2_b'])


def make_params(key, d_model, d_ff, n_heads, kq_same):
    def xavier(k, shape):
        fan_in, fan_out = shape[0], shape[1]
        lim = math.sqrt(6.0 / (fan_in + fan_out))
        return jax.random.uniform(k, shape, jnp.float32, -lim, lim)

    ks = jax.random.split(key, 8)
    wk = xavier(ks[0], (d_model, d_model))
    wv = xavier(ks[1], (d_model, d_model))
    wq = wk if kq_same else xavier(ks[2], (d_model, d_model))
    wo = xavier(ks[3], (d_model, d_model))
    w1 = xavier(ks[4], (d_model, d_ff))
    w2 = xavier(ks[5], (d_ff, d_model))
    glim = math.sqrt(6.0 / (1 + n_heads))
    gammas = jax.random.uniform(ks[6], (n_heads, 1, 1), jnp.float32, -glim, glim)
    zd = jnp.zeros((1, d_model), jnp.float32)
    return dict(
        wq=wq, bq=zd, wk=wk, bk=zd, wv=wv, bv=zd, wo=wo, bo=zd,
        gammas=gammas,
        ln1_w=jnp.ones((1, d_model), jnp.float32), ln1_b=zd,
        w1=w1, b1=jnp.zeros((1, d_ff), jnp.float32),
        w2=w2, b2=zd,
        ln2_w=jnp.ones((1, d_model), jnp.float32), ln2_b=zd,
    )


def reference(query, key, values, p, *, mask, n_heads, apply_pos=True):
    """Pure-JAX (f32) mirror of the PyTorch forward pass (dropout = identity)."""
    B, S, D = query.shape
    d_k = D // n_heads

    def lin(x, w, b):
        return x @ w + b[0]

    q = lin(query, p['wq'], p['bq']).reshape(B, S, n_heads, d_k).transpose(0, 2, 1, 3)
    k = lin(key, p['wk'], p['bk']).reshape(B, S, n_heads, d_k).transpose(0, 2, 1, 3)
    v = lin(values, p['wv'], p['bv']).reshape(B, S, n_heads, d_k).transpose(0, 2, 1, 3)

    row = jnp.arange(S)[:, None]
    col = jnp.arange(S)[None, :]
    m = (col - row) < mask
    pe = jnp.abs(col - row).astype(jnp.float32)

    scores = jnp.einsum('bhqd,bhkd->bhqk', q, k) / math.sqrt(d_k)
    sm = jax.nn.softmax(jnp.where(m, scores, -1e32), axis=-1) * m
    distcum = jnp.cumsum(sm, axis=-1)
    disttotal = jnp.sum(sm, axis=-1, keepdims=True)
    dist_scores = jnp.sqrt(jnp.maximum((disttotal - distcum) * pe, 0.0))
    gamma = -jax.nn.softplus(p['gammas'].reshape(n_heads))[None, :, None, None]
    total_effect = jnp.clip(jnp.exp(dist_scores * gamma), 1e-5, 1e5)
    scores = jax.nn.softmax(jnp.where(m, scores * total_effect, -1e32), axis=-1)
    if mask == 0:
        scores = scores.at[:, :, 0, :].set(0.0)
    out = jnp.einsum('bhqk,bhkd->bhqd', scores, v).transpose(0, 2, 1, 3).reshape(B, S, D)
    out = lin(out, p['wo'], p['bo'])

    def ln_(x, w, b):
        mu = x.mean(-1, keepdims=True)
        var = ((x - mu) ** 2).mean(-1, keepdims=True)
        return (x - mu) / jnp.sqrt(var + 1e-5) * w[0] + b[0]

    x = ln_(query + out, p['ln1_w'], p['ln1_b'])
    if apply_pos:
        h = jnp.maximum(lin(x, p['w1'], p['b1']), 0.0)
        x = ln_(x + lin(h, p['w2'], p['b2']), p['ln2_w'], p['ln2_b'])
    return x


if __name__ == "__main__":
    B, S, D = 2, 8, 32
    n_heads, d_ff = 4, 64
    kq_same = True

    root = jax.random.PRNGKey(0)
    kp, kq_, kk_, kv_ = jax.random.split(root, 4)
    params = make_params(kp, D, d_ff, n_heads, kq_same)

    query = jax.random.normal(kq_, (B, S, D), jnp.float32)
    key_ = jax.random.normal(kk_, (B, S, D), jnp.float32)
    values = jax.random.normal(kv_, (B, S, D), jnp.float32)

    # ---- mask = 1 (peek current + past, no zero_pad) -----------------------
    ref1 = reference(query, key_, values, params, mask=1, n_heads=n_heads)

    # structural check: pure-f32 compute path must match the PyTorch math tightly
    out_f32 = transformer_layer(query, key_, values, params, mask=1,
                                n_heads=n_heads, compute_dtype=jnp.float32)
    out_f32 = jax.block_until_ready(out_f32)
    assert out_f32.shape == (B, S, D)
    assert bool(jnp.all(jnp.isfinite(out_f32)))
    err32 = float(jnp.max(jnp.abs(out_f32 - ref1)))
    assert err32 < 1e-4, err32

    # production path: bf16 MXU inputs, f32 accumulation / softmax chain
    out_bf16 = transformer_layer(query, key_, values, params, mask=1,
                                 n_heads=n_heads, compute_dtype=jnp.bfloat16)
    out_bf16 = jax.block_until_ready(out_bf16)
    assert bool(jnp.all(jnp.isfinite(out_bf16)))
    errbf = float(jnp.max(jnp.abs(out_bf16 - ref1)))
    assert errbf < 5e-2, errbf

    # ---- mask = 0 (past only, zero_pad on row 0) ---------------------------
    ref0 = reference(query, key_, values, params, mask=0, n_heads=n_heads)
    out0 = transformer_layer(query, key_, values, params, mask=0,
                             n_heads=n_heads, compute_dtype=jnp.float32)
    out0 = jax.block_until_ready(out0)
    assert bool(jnp.all(jnp.isfinite(out0)))
    err0 = float(jnp.max(jnp.abs(out0 - ref0)))
    assert err0 < 1e-4, err0

    print("KERNEL_OK")
</pallas_src>

<mosaic_0001>
module attributes {stable_mosaic.version = 11 : i64} {
  func.func @transformer_layer_kernel(%arg0: i32, %arg1: i32, %arg2: memref<1x8x32xf32, #tpu.memory_space<vmem>>, %arg3: memref<1x8x32xf32, #tpu.memory_space<vmem>>, %arg4: memref<1x8x32xf32, #tpu.memory_space<vmem>>, %arg5: memref<32x32xf32, #tpu.memory_space<vmem>>, %arg6: memref<1x32xf32, #tpu.memory_space<vmem>>, %arg7: memref<32x32xf32, #tpu.memory_space<vmem>>, %arg8: memref<1x32xf32, #tpu.memory_space<vmem>>, %arg9: memref<32x32xf32, #tpu.memory_space<vmem>>, %arg10: memref<1x32xf32, #tpu.memory_space<vmem>>, %arg11: memref<32x32xf32, #tpu.memory_space<vmem>>, %arg12: memref<1x32xf32, #tpu.memory_space<vmem>>, %arg13: memref<4x1x1xf32, #tpu.memory_space<vmem>>, %arg14: memref<1x32xf32, #tpu.memory_space<vmem>>, %arg15: memref<1x32xf32, #tpu.memory_space<vmem>>, %arg16: memref<32x64xf32, #tpu.memory_space<vmem>>, %arg17: memref<1x64xf32, #tpu.memory_space<vmem>>, %arg18: memref<64x32xf32, #tpu.memory_space<vmem>>, %arg19: memref<1x32xf32, #tpu.memory_space<vmem>>, %arg20: memref<1x32xf32, #tpu.memory_space<vmem>>, %arg21: memref<1x32xf32, #tpu.memory_space<vmem>>, %arg22: memref<1x8x32xf32, #tpu.memory_space<vmem>>) attributes {dimension_semantics = [#tpu.dimension_semantics<parallel>, #tpu.dimension_semantics<parallel>], iteration_bounds = array<i64: 2, 1>, scalar_prefetch = 0 : i64, scratch_operands = 0 : i64, tpu.core_type = #tpu.core_type<tc>, window_params = [{transform_indices = @transform_0, window_bounds = array<i64: 1, 8, 32>}, {transform_indices = @transform_1, window_bounds = array<i64: 1, 8, 32>}, {transform_indices = @transform_2, window_bounds = array<i64: 1, 8, 32>}, {pipeline_mode = #tpu.pipeline_mode<synchronous>, transform_indices = @transform_3, window_bounds = array<i64: 32, 32>}, {pipeline_mode = #tpu.pipeline_mode<synchronous>, transform_indices = @transform_4, window_bounds = array<i64: 1, 32>}, {pipeline_mode = #tpu.pipeline_mode<synchronous>, transform_indices = @transform_5, window_bounds = array<i64: 32, 32>}, {pipeline_mode = #tpu.pipeline_mode<synchronous>, transform_indices = @transform_6, window_bounds = array<i64: 1, 32>}, {pipeline_mode = #tpu.pipeline_mode<synchronous>, transform_indices = @transform_7, window_bounds = array<i64: 32, 32>}, {pipeline_mode = #tpu.pipeline_mode<synchronous>, transform_indices = @transform_8, window_bounds = array<i64: 1, 32>}, {pipeline_mode = #tpu.pipeline_mode<synchronous>, transform_indices = @transform_9, window_bounds = array<i64: 32, 32>}, {pipeline_mode = #tpu.pipeline_mode<synchronous>, transform_indices = @transform_10, window_bounds = array<i64: 1, 32>}, {pipeline_mode = #tpu.pipeline_mode<synchronous>, transform_indices = @transform_11, window_bounds = array<i64: 4, 1, 1>}, {pipeline_mode = #tpu.pipeline_mode<synchronous>, transform_indices = @transform_12, window_bounds = array<i64: 1, 32>}, {pipeline_mode = #tpu.pipeline_mode<synchronous>, transform_indices = @transform_13, window_bounds = array<i64: 1, 32>}, {pipeline_mode = #tpu.pipeline_mode<synchronous>, transform_indices = @transform_14, window_bounds = array<i64: 32, 64>}, {pipeline_mode = #tpu.pipeline_mode<synchronous>, transform_indices = @transform_15, window_bounds = array<i64: 1, 64>}, {pipeline_mode = #tpu.pipeline_mode<synchronous>, transform_indices = @transform_16, window_bounds = array<i64: 64, 32>}, {pipeline_mode = #tpu.pipeline_mode<synchronous>, transform_indices = @transform_17, window_bounds = array<i64: 1, 32>}, {pipeline_mode = #tpu.pipeline_mode<synchronous>, transform_indices = @transform_18, window_bounds = array<i64: 1, 32>}, {pipeline_mode = #tpu.pipeline_mode<synchronous>, transform_indices = @transform_19, window_bounds = array<i64: 1, 32>}, {transform_indices = @transform_20, window_bounds = array<i64: 1, 8, 32>}]} {
    %c8_i32 = arith.constant 8 : i32
    %0 = arith.muli %arg1, %c8_i32 : i32
    %c0 = arith.constant 0 : index
    %c0_0 = arith.constant 0 : index
    %c0_1 = arith.constant 0 : index
    %1 = vector.load %arg2[%c0, %c0_0, %c0_1] : memref<1x8x32xf32, #tpu.memory_space<vmem>>, vector<1x8x32xf32>
    %2 = vector.shape_cast %1 : vector<1x8x32xf32> to vector<8x32xf32>
    %c0_2 = arith.constant 0 : index
    %c0_3 = arith.constant 0 : index
    %c0_4 = arith.constant 0 : index
    %3 = vector.load %arg3[%c0_2, %c0_3, %c0_4] : memref<1x8x32xf32, #tpu.memory_space<vmem>>, vector<1x8x32xf32>
    %4 = vector.shape_cast %3 : vector<1x8x32xf32> to vector<8x32xf32>
    %c0_5 = arith.constant 0 : index
    %c0_6 = arith.constant 0 : index
    %c0_7 = arith.constant 0 : index
    %5 = vector.load %arg4[%c0_5, %c0_6, %c0_7] : memref<1x8x32xf32, #tpu.memory_space<vmem>>, vector<1x8x32xf32>
    %6 = vector.shape_cast %5 : vector<1x8x32xf32> to vector<8x32xf32>
    %c0_8 = arith.constant 0 : index
    %c0_9 = arith.constant 0 : index
    %7 = vector.load %arg5[%c0_8, %c0_9] : memref<32x32xf32, #tpu.memory_space<vmem>>, vector<32x32xf32>
    %cst = arith.constant dense<0.000000e+00> : vector<8x32xf32>
    %8 = tpu.matmul %2, %7, %cst {dimension_numbers = #tpu.dot_dimension_numbers<[1], [0], [0], [1], [0, 0, 1, 1], [], []>} : vector<8x32xf32>, vector<32x32xf32>, vector<8x32xf32> -> vector<8x32xf32>
    %c0_10 = arith.constant 0 : index
    %c0_11 = arith.constant 0 : index
    %9 = vector.load %arg6[%c0_10, %c0_11] : memref<1x32xf32, #tpu.memory_space<vmem>>, vector<1x32xf32>
    %10 = vector.broadcast %9 : vector<1x32xf32> to vector<8x32xf32>
    %11 = arith.addf %8, %10 : vector<8x32xf32>
    %c0_12 = arith.constant 0 : index
    %c0_13 = arith.constant 0 : index
    %12 = vector.load %arg7[%c0_12, %c0_13] : memref<32x32xf32, #tpu.memory_space<vmem>>, vector<32x32xf32>
    %cst_14 = arith.constant dense<0.000000e+00> : vector<8x32xf32>
    %13 = tpu.matmul %4, %12, %cst_14 {dimension_numbers = #tpu.dot_dimension_numbers<[1], [0], [0], [1], [0, 0, 1, 1], [], []>} : vector<8x32xf32>, vector<32x32xf32>, vector<8x32xf32> -> vector<8x32xf32>
    %c0_15 = arith.constant 0 : index
    %c0_16 = arith.constant 0 : index
    %14 = vector.load %arg8[%c0_15, %c0_16] : memref<1x32xf32, #tpu.memory_space<vmem>>, vector<1x32xf32>
    %15 = vector.broadcast %14 : vector<1x32xf32> to vector<8x32xf32>
    %16 = arith.addf %13, %15 : vector<8x32xf32>
    %c0_17 = arith.constant 0 : index
    %c0_18 = arith.constant 0 : index
    %17 = vector.load %arg9[%c0_17, %c0_18] : memref<32x32xf32, #tpu.memory_space<vmem>>, vector<32x32xf32>
    %cst_19 = arith.constant dense<0.000000e+00> : vector<8x32xf32>
    %18 = tpu.matmul %6, %17, %cst_19 {dimension_numbers = #tpu.dot_dimension_numbers<[1], [0], [0], [1], [0, 0, 1, 1], [], []>} : vector<8x32xf32>, vector<32x32xf32>, vector<8x32xf32> -> vector<8x32xf32>
    %c0_20 = arith.constant 0 : index
    %c0_21 = arith.constant 0 : index
    %19 = vector.load %arg10[%c0_20, %c0_21] : memref<1x32xf32, #tpu.memory_space<vmem>>, vector<1x32xf32>
    %20 = vector.broadcast %19 : vector<1x32xf32> to vector<8x32xf32>
    %21 = arith.addf %18, %20 : vector<8x32xf32>
    %cst_22 = arith.constant 0.353553385 : f32
    %22 = vector.broadcast %cst_22 : f32 to vector<8x32xf32>
    %23 = arith.mulf %11, %22 : vector<8x32xf32>
    %24 = vector.extract_strided_slice %23 {offsets = [0, 0], sizes = [8, 8], strides = [1, 1]} : vector<8x32xf32> to vector<8x8xf32>
    %25 = vector.extract_strided_slice %23 {offsets = [0, 8], sizes = [8, 8], strides = [1, 1]} : vector<8x32xf32> to vector<8x8xf32>
    %26 = vector.extract_strided_slice %23 {offsets = [0, 16], sizes = [8, 8], strides = [1, 1]} : vector<8x32xf32> to vector<8x8xf32>
    %27 = vector.extract_strided_slice %23 {offsets = [0, 24], sizes = [8, 8], strides = [1, 1]} : vector<8x32xf32> to vector<8x8xf32>
    %28 = vector.shape_cast %24 : vector<8x8xf32> to vector<1x8x8xf32>
    %29 = vector.shape_cast %25 : vector<8x8xf32> to vector<1x8x8xf32>
    %30 = vector.shape_cast %26 : vector<8x8xf32> to vector<1x8x8xf32>
    %31 = vector.shape_cast %27 : vector<8x8xf32> to vector<1x8x8xf32>
    %32 = tpu.concatenate %28, %29, %30, %31 in 0 : vector<1x8x8xf32>, vector<1x8x8xf32>, vector<1x8x8xf32>, vector<1x8x8xf32> -> vector<4x8x8xf32>
    %33 = vector.extract_strided_slice %16 {offsets = [0, 0], sizes = [8, 8], strides = [1, 1]} : vector<8x32xf32> to vector<8x8xf32>
    %34 = vector.extract_strided_slice %16 {offsets = [0, 8], sizes = [8, 8], strides = [1, 1]} : vector<8x32xf32> to vector<8x8xf32>
    %35 = vector.extract_strided_slice %16 {offsets = [0, 16], sizes = [8, 8], strides = [1, 1]} : vector<8x32xf32> to vector<8x8xf32>
    %36 = vector.extract_strided_slice %16 {offsets = [0, 24], sizes = [8, 8], strides = [1, 1]} : vector<8x32xf32> to vector<8x8xf32>
    %37 = vector.shape_cast %33 : vector<8x8xf32> to vector<1x8x8xf32>
    %38 = vector.shape_cast %34 : vector<8x8xf32> to vector<1x8x8xf32>
    %39 = vector.shape_cast %35 : vector<8x8xf32> to vector<1x8x8xf32>
    %40 = vector.shape_cast %36 : vector<8x8xf32> to vector<1x8x8xf32>
    %41 = tpu.concatenate %37, %38, %39, %40 in 0 : vector<1x8x8xf32>, vector<1x8x8xf32>, vector<1x8x8xf32>, vector<1x8x8xf32> -> vector<4x8x8xf32>
    %42 = vector.extract_strided_slice %21 {offsets = [0, 0], sizes = [8, 8], strides = [1, 1]} : vector<8x32xf32> to vector<8x8xf32>
    %43 = vector.extract_strided_slice %21 {offsets = [0, 8], sizes = [8, 8], strides = [1, 1]} : vector<8x32xf32> to vector<8x8xf32>
    %44 = vector.extract_strided_slice %21 {offsets = [0, 16], sizes = [8, 8], strides = [1, 1]} : vector<8x32xf32> to vector<8x8xf32>
    %45 = vector.extract_strided_slice %21 {offsets = [0, 24], sizes = [8, 8], strides = [1, 1]} : vector<8x32xf32> to vector<8x8xf32>
    %46 = vector.shape_cast %42 : vector<8x8xf32> to vector<1x8x8xf32>
    %47 = vector.shape_cast %43 : vector<8x8xf32> to vector<1x8x8xf32>
    %48 = vector.shape_cast %44 : vector<8x8xf32> to vector<1x8x8xf32>
    %49 = vector.shape_cast %45 : vector<8x8xf32> to vector<1x8x8xf32>
    %50 = tpu.concatenate %46, %47, %48, %49 in 0 : vector<1x8x8xf32>, vector<1x8x8xf32>, vector<1x8x8xf32>, vector<1x8x8xf32> -> vector<4x8x8xf32>
    "tpu.trace_start"() <{level = 10 : i32, message = "hqd,hkd->hqk"}> : () -> ()
    %cst_23 = arith.constant dense<0.000000e+00> : vector<4x8x8xf32>
    %51 = tpu.matmul %32, %41, %cst_23 {dimension_numbers = #tpu.dot_dimension_numbers<[2], [2], [1], [1], [0, 0, 0, 1, 1, 1], [0], [0]>} : vector<4x8x8xf32>, vector<4x8x8xf32>, vector<4x8x8xf32> -> vector<4x8x8xf32>
    "tpu.trace_stop"() : () -> ()
    %52 = tpu.iota {dimensions = array<i32: 0>} : vector<8x8xi32>
    %53 = vector.broadcast %0 : i32 to vector<8x8xi32>
    %54 = arith.addi %52, %53 : vector<8x8xi32>
    %55 = tpu.iota {dimensions = array<i32: 1>} : vector<8x8xi32>
    %56 = arith.subi %55, %54 : vector<8x8xi32>
    %c1_i32 = arith.constant 1 : i32
    %57 = vector.broadcast %c1_i32 : i32 to vector<8x8xi32>
    %58 = arith.cmpi slt, %56, %57 : vector<8x8xi32>
    %59 = arith.extui %58 : vector<8x8xi1> to vector<8x8xi32>
    %60 = arith.sitofp %59 : vector<8x8xi32> to vector<8x8xf32>
    %61 = arith.subi %55, %54 : vector<8x8xi32>
    %62 = math.absi %61 : vector<8x8xi32>
    %63 = arith.sitofp %62 : vector<8x8xi32> to vector<8x8xf32>
    %cst_24 = arith.constant -1.000000e+32 : f32
    %64 = vector.shape_cast %58 : vector<8x8xi1> to vector<1x8x8xi1>
    %65 = vector.broadcast %64 : vector<1x8x8xi1> to vector<4x8x8xi1>
    %66 = vector.broadcast %cst_24 : f32 to vector<4x8x8xf32>
    %67 = arith.select %65, %51, %66 : vector<4x8x8xi1>, vector<4x8x8xf32>
    %cst_25 = arith.constant dense<0xFF800000> : vector<4x8xf32>
    %68 = vector.multi_reduction <maximumf>, %67, %cst_25 [2] : vector<4x8x8xf32> to vector<4x8xf32>
    %69 = vector.shape_cast %68 : vector<4x8xf32> to vector<4x8x1xf32>
    %70 = vector.broadcast %69 : vector<4x8x1xf32> to vector<4x8x8xf32>
    %71 = arith.subf %67, %70 : vector<4x8x8xf32>
    %72 = math.exp %71 : vector<4x8x8xf32>
    %cst_26 = arith.constant dense<0.000000e+00> : vector<4x8xf32>
    %73 = vector.multi_reduction <add>, %72, %cst_26 [2] : vector<4x8x8xf32> to vector<4x8xf32>
    %74 = vector.shape_cast %73 : vector<4x8xf32> to vector<4x8x1xf32>
    %75 = vector.broadcast %74 : vector<4x8x1xf32> to vector<4x8x8xf32>
    %76 = arith.divf %72, %75 : vector<4x8x8xf32>
    %77 = vector.shape_cast %60 : vector<8x8xf32> to vector<1x8x8xf32>
    %78 = vector.broadcast %77 : vector<1x8x8xf32> to vector<4x8x8xf32>
    %79 = arith.mulf %76, %78 : vector<4x8x8xf32>
    %cst_27 = arith.constant 0.000000e+00 : f32
    %80 = vector.broadcast %cst_27 : f32 to vector<4x8x1xf32>
    %81 = vector.extract_strided_slice %79 {offsets = [0, 0, 1], sizes = [4, 8, 7], strides = [1, 1, 1]} : vector<4x8x8xf32> to vector<4x8x7xf32>
    %82 = tpu.concatenate %81, %80 in 2 : vector<4x8x7xf32>, vector<4x8x1xf32> -> vector<4x8x8xf32>
    %83 = arith.addf %79, %82 : vector<4x8x8xf32>
    %cst_28 = arith.constant 0.000000e+00 : f32
    %84 = vector.broadcast %cst_28 : f32 to vector<4x8x2xf32>
    %85 = vector.extract_strided_slice %83 {offsets = [0, 0, 2], sizes = [4, 8, 6], strides = [1, 1, 1]} : vector<4x8x8xf32> to vector<4x8x6xf32>
    %86 = tpu.concatenate %85, %84 in 2 : vector<4x8x6xf32>, vector<4x8x2xf32> -> vector<4x8x8xf32>
    %87 = arith.addf %83, %86 : vector<4x8x8xf32>
    %cst_29 = arith.constant 0.000000e+00 : f32
    %88 = vector.broadcast %cst_29 : f32 to vector<4x8x4xf32>
    %89 = vector.extract_strided_slice %87 {offsets = [0, 0, 4], sizes = [4, 8, 4], strides = [1, 1, 1]} : vector<4x8x8xf32> to vector<4x8x4xf32>
    %90 = tpu.concatenate %89, %88 in 2 : vector<4x8x4xf32>, vector<4x8x4xf32> -> vector<4x8x8xf32>
    %91 = arith.addf %87, %90 : vector<4x8x8xf32>
    %92 = arith.subf %91, %79 : vector<4x8x8xf32>
    %93 = vector.shape_cast %63 : vector<8x8xf32> to vector<1x8x8xf32>
    %94 = vector.broadcast %93 : vector<1x8x8xf32> to vector<4x8x8xf32>
    %95 = arith.mulf %92, %94 : vector<4x8x8xf32>
    %cst_30 = arith.constant 0.000000e+00 : f32
    %96 = vector.broadcast %cst_30 : f32 to vector<4x8x8xf32>
    %97 = arith.maximumf %95, %96 : vector<4x8x8xf32>
    %98 = math.sqrt %97 : vector<4x8x8xf32>
    %c0_31 = arith.constant 0 : index
    %c0_32 = arith.constant 0 : index
    %c0_33 = arith.constant 0 : index
    %99 = vector.load %arg13[%c0_31, %c0_32, %c0_33] : memref<4x1x1xf32, #tpu.memory_space<vmem>>, vector<4x1x1xf32>
    %100 = math.exp %99 : vector<4x1x1xf32>
    %cst_34 = arith.constant 1.000000e+00 : f32
    %101 = vector.broadcast %cst_34 : f32 to vector<4x1x1xf32>
    %102 = arith.addf %101, %100 : vector<4x1x1xf32>
    %103 = math.log %102 : vector<4x1x1xf32>
    %cst_35 = arith.constant 0.000000e+00 : f32
    %104 = vector.broadcast %cst_35 : f32 to vector<4x1x1xf32>
    %105 = arith.subf %104, %103 : vector<4x1x1xf32>
    %106 = vector.broadcast %105 : vector<4x1x1xf32> to vector<4x8x8xf32>
    %107 = arith.mulf %98, %106 : vector<4x8x8xf32>
    %108 = math.exp %107 : vector<4x8x8xf32>
    %cst_36 = arith.constant 9.99999974E-6 : f32
    %cst_37 = arith.constant 1.000000e+05 : f32
    %109 = vector.broadcast %cst_36 : f32 to vector<4x8x8xf32>
    %110 = arith.maximumf %109, %108 : vector<4x8x8xf32>
    %111 = vector.broadcast %cst_37 : f32 to vector<4x8x8xf32>
    %112 = arith.minimumf %111, %110 : vector<4x8x8xf32>
    %113 = arith.mulf %51, %112 : vector<4x8x8xf32>
    %cst_38 = arith.constant -1.000000e+32 : f32
    %114 = vector.shape_cast %58 : vector<8x8xi1> to vector<1x8x8xi1>
    %115 = vector.broadcast %114 : vector<1x8x8xi1> to vector<4x8x8xi1>
    %116 = vector.broadcast %cst_38 : f32 to vector<4x8x8xf32>
    %117 = arith.select %115, %113, %116 : vector<4x8x8xi1>, vector<4x8x8xf32>
    %cst_39 = arith.constant dense<0xFF800000> : vector<4x8xf32>
    %118 = vector.multi_reduction <maximumf>, %117, %cst_39 [2] : vector<4x8x8xf32> to vector<4x8xf32>
    %119 = vector.shape_cast %118 : vector<4x8xf32> to vector<4x8x1xf32>
    %120 = vector.broadcast %119 : vector<4x8x1xf32> to vector<4x8x8xf32>
    %121 = arith.subf %117, %120 : vector<4x8x8xf32>
    %122 = math.exp %121 : vector<4x8x8xf32>
    %cst_40 = arith.constant dense<0.000000e+00> : vector<4x8xf32>
    %123 = vector.multi_reduction <add>, %122, %cst_40 [2] : vector<4x8x8xf32> to vector<4x8xf32>
    %124 = vector.shape_cast %123 : vector<4x8xf32> to vector<4x8x1xf32>
    %125 = vector.broadcast %124 : vector<4x8x1xf32> to vector<4x8x8xf32>
    %126 = arith.divf %122, %125 : vector<4x8x8xf32>
    "tpu.trace_start"() <{level = 10 : i32, message = "hqk,hkd->hqd"}> : () -> ()
    %cst_41 = arith.constant dense<0.000000e+00> : vector<4x8x8xf32>
    %127 = tpu.matmul %126, %50, %cst_41 {dimension_numbers = #tpu.dot_dimension_numbers<[2], [1], [1], [2], [0, 0, 0, 1, 1, 2], [0], [0]>} : vector<4x8x8xf32>, vector<4x8x8xf32>, vector<4x8x8xf32> -> vector<4x8x8xf32>
    "tpu.trace_stop"() : () -> ()
    %128 = vector.extract_strided_slice %127 {offsets = [0, 0, 0], sizes = [1, 8, 8], strides = [1, 1, 1]} : vector<4x8x8xf32> to vector<1x8x8xf32>
    %129 = vector.shape_cast %128 : vector<1x8x8xf32> to vector<8x8xf32>
    %130 = vector.extract_strided_slice %127 {offsets = [1, 0, 0], sizes = [1, 8, 8], strides = [1, 1, 1]} : vector<4x8x8xf32> to vector<1x8x8xf32>
    %131 = vector.shape_cast %130 : vector<1x8x8xf32> to vector<8x8xf32>
    %132 = vector.extract_strided_slice %127 {offsets = [2, 0, 0], sizes = [1, 8, 8], strides = [1, 1, 1]} : vector<4x8x8xf32> to vector<1x8x8xf32>
    %133 = vector.shape_cast %132 : vector<1x8x8xf32> to vector<8x8xf32>
    %134 = vector.extract_strided_slice %127 {offsets = [3, 0, 0], sizes = [1, 8, 8], strides = [1, 1, 1]} : vector<4x8x8xf32> to vector<1x8x8xf32>
    %135 = vector.shape_cast %134 : vector<1x8x8xf32> to vector<8x8xf32>
    %136 = tpu.concatenate %129, %131, %133, %135 in 1 : vector<8x8xf32>, vector<8x8xf32>, vector<8x8xf32>, vector<8x8xf32> -> vector<8x32xf32>
    %c0_42 = arith.constant 0 : index
    %c0_43 = arith.constant 0 : index
    %137 = vector.load %arg11[%c0_42, %c0_43] : memref<32x32xf32, #tpu.memory_space<vmem>>, vector<32x32xf32>
    %cst_44 = arith.constant dense<0.000000e+00> : vector<8x32xf32>
    %138 = tpu.matmul %136, %137, %cst_44 {dimension_numbers = #tpu.dot_dimension_numbers<[1], [0], [0], [1], [0, 0, 1, 1], [], []>} : vector<8x32xf32>, vector<32x32xf32>, vector<8x32xf32> -> vector<8x32xf32>
    %c0_45 = arith.constant 0 : index
    %c0_46 = arith.constant 0 : index
    %139 = vector.load %arg12[%c0_45, %c0_46] : memref<1x32xf32, #tpu.memory_space<vmem>>, vector<1x32xf32>
    %140 = vector.broadcast %139 : vector<1x32xf32> to vector<8x32xf32>
    %141 = arith.addf %138, %140 : vector<8x32xf32>
    %142 = arith.addf %2, %141 : vector<8x32xf32>
    %c0_47 = arith.constant 0 : index
    %c0_48 = arith.constant 0 : index
    %143 = vector.load %arg14[%c0_47, %c0_48] : memref<1x32xf32, #tpu.memory_space<vmem>>, vector<1x32xf32>
    %c0_49 = arith.constant 0 : index
    %c0_50 = arith.constant 0 : index
    %144 = vector.load %arg15[%c0_49, %c0_50] : memref<1x32xf32, #tpu.memory_space<vmem>>, vector<1x32xf32>
    %cst_51 = arith.constant dense<0.000000e+00> : vector<8xf32>
    %145 = vector.multi_reduction <add>, %142, %cst_51 [1] : vector<8x32xf32> to vector<8xf32>
    %146 = vector.shape_cast %145 : vector<8xf32> to vector<8x1xf32>
    %cst_52 = arith.constant 3.200000e+01 : f32
    %147 = vector.broadcast %cst_52 : f32 to vector<8x1xf32>
    %148 = arith.divf %146, %147 : vector<8x1xf32>
    %149 = vector.broadcast %148 : vector<8x1xf32> to vector<8x32xf32>
    %150 = arith.subf %142, %149 : vector<8x32xf32>
    %151 = arith.mulf %150, %150 : vector<8x32xf32>
    %cst_53 = arith.constant dense<0.000000e+00> : vector<8xf32>
    %152 = vector.multi_reduction <add>, %151, %cst_53 [1] : vector<8x32xf32> to vector<8xf32>
    %153 = vector.shape_cast %152 : vector<8xf32> to vector<8x1xf32>
    %cst_54 = arith.constant 3.200000e+01 : f32
    %154 = vector.broadcast %cst_54 : f32 to vector<8x1xf32>
    %155 = arith.divf %153, %154 : vector<8x1xf32>
    %156 = vector.broadcast %148 : vector<8x1xf32> to vector<8x32xf32>
    %157 = arith.subf %142, %156 : vector<8x32xf32>
    %cst_55 = arith.constant 9.99999974E-6 : f32
    %158 = vector.broadcast %cst_55 : f32 to vector<8x1xf32>
    %159 = arith.addf %155, %158 : vector<8x1xf32>
    %160 = math.rsqrt %159 : vector<8x1xf32>
    %161 = vector.broadcast %160 : vector<8x1xf32> to vector<8x32xf32>
    %162 = arith.mulf %157, %161 : vector<8x32xf32>
    %163 = vector.broadcast %143 : vector<1x32xf32> to vector<8x32xf32>
    %164 = arith.mulf %162, %163 : vector<8x32xf32>
    %165 = vector.broadcast %144 : vector<1x32xf32> to vector<8x32xf32>
    %166 = arith.addf %164, %165 : vector<8x32xf32>
    %c0_56 = arith.constant 0 : index
    %c0_57 = arith.constant 0 : index
    %167 = vector.load %arg16[%c0_56, %c0_57] : memref<32x64xf32, #tpu.memory_space<vmem>>, vector<32x64xf32>
    %cst_58 = arith.constant dense<0.000000e+00> : vector<8x64xf32>
    %168 = tpu.matmul %166, %167, %cst_58 {dimension_numbers = #tpu.dot_dimension_numbers<[1], [0], [0], [1], [0, 0, 1, 1], [], []>} : vector<8x32xf32>, vector<32x64xf32>, vector<8x64xf32> -> vector<8x64xf32>
    %c0_59 = arith.constant 0 : index
    %c0_60 = arith.constant 0 : index
    %169 = vector.load %arg17[%c0_59, %c0_60] : memref<1x64xf32, #tpu.memory_space<vmem>>, vector<1x64xf32>
    %170 = vector.broadcast %169 : vector<1x64xf32> to vector<8x64xf32>
    %171 = arith.addf %168, %170 : vector<8x64xf32>
    %cst_61 = arith.constant 0.000000e+00 : f32
    %172 = vector.broadcast %cst_61 : f32 to vector<8x64xf32>
    %173 = arith.maximumf %171, %172 : vector<8x64xf32>
    %c0_62 = arith.constant 0 : index
    %c0_63 = arith.constant 0 : index
    %174 = vector.load %arg18[%c0_62, %c0_63] : memref<64x32xf32, #tpu.memory_space<vmem>>, vector<64x32xf32>
    %cst_64 = arith.constant dense<0.000000e+00> : vector<8x32xf32>
    %175 = tpu.matmul %173, %174, %cst_64 {dimension_numbers = #tpu.dot_dimension_numbers<[1], [0], [0], [1], [0, 0, 1, 1], [], []>} : vector<8x64xf32>, vector<64x32xf32>, vector<8x32xf32> -> vector<8x32xf32>
    %c0_65 = arith.constant 0 : index
    %c0_66 = arith.constant 0 : index
    %176 = vector.load %arg19[%c0_65, %c0_66] : memref<1x32xf32, #tpu.memory_space<vmem>>, vector<1x32xf32>
    %177 = vector.broadcast %176 : vector<1x32xf32> to vector<8x32xf32>
    %178 = arith.addf %175, %177 : vector<8x32xf32>
    %179 = arith.addf %166, %178 : vector<8x32xf32>
    %c0_67 = arith.constant 0 : index
    %c0_68 = arith.constant 0 : index
    %180 = vector.load %arg20[%c0_67, %c0_68] : memref<1x32xf32, #tpu.memory_space<vmem>>, vector<1x32xf32>
    %c0_69 = arith.constant 0 : index
    %c0_70 = arith.constant 0 : index
    %181 = vector.load %arg21[%c0_69, %c0_70] : memref<1x32xf32, #tpu.memory_space<vmem>>, vector<1x32xf32>
    %cst_71 = arith.constant dense<0.000000e+00> : vector<8xf32>
    %182 = vector.multi_reduction <add>, %179, %cst_71 [1] : vector<8x32xf32> to vector<8xf32>
    %183 = vector.shape_cast %182 : vector<8xf32> to vector<8x1xf32>
    %cst_72 = arith.constant 3.200000e+01 : f32
    %184 = vector.broadcast %cst_72 : f32 to vector<8x1xf32>
    %185 = arith.divf %183, %184 : vector<8x1xf32>
    %186 = vector.broadcast %185 : vector<8x1xf32> to vector<8x32xf32>
    %187 = arith.subf %179, %186 : vector<8x32xf32>
    %188 = arith.mulf %187, %187 : vector<8x32xf32>
    %cst_73 = arith.constant dense<0.000000e+00> : vector<8xf32>
    %189 = vector.multi_reduction <add>, %188, %cst_73 [1] : vector<8x32xf32> to vector<8xf32>
    %190 = vector.shape_cast %189 : vector<8xf32> to vector<8x1xf32>
    %cst_74 = arith.constant 3.200000e+01 : f32
    %191 = vector.broadcast %cst_74 : f32 to vector<8x1xf32>
    %192 = arith.divf %190, %191 : vector<8x1xf32>
    %193 = vector.broadcast %185 : vector<8x1xf32> to vector<8x32xf32>
    %194 = arith.subf %179, %193 : vector<8x32xf32>
    %cst_75 = arith.constant 9.99999974E-6 : f32
    %195 = vector.broadcast %cst_75 : f32 to vector<8x1xf32>
    %196 = arith.addf %192, %195 : vector<8x1xf32>
    %197 = math.rsqrt %196 : vector<8x1xf32>
    %198 = vector.broadcast %197 : vector<8x1xf32> to vector<8x32xf32>
    %199 = arith.mulf %194, %198 : vector<8x32xf32>
    %200 = vector.broadcast %180 : vector<1x32xf32> to vector<8x32xf32>
    %201 = arith.mulf %199, %200 : vector<8x32xf32>
    %202 = vector.broadcast %181 : vector<1x32xf32> to vector<8x32xf32>
    %203 = arith.addf %201, %202 : vector<8x32xf32>
    %c0_76 = arith.constant 0 : index
    %c0_77 = arith.constant 0 : index
    %c0_78 = arith.constant 0 : index
    %204 = vector.load %arg22[%c0_76, %c0_77, %c0_78] : memref<1x8x32xf32, #tpu.memory_space<vmem>>, vector<1x8x32xf32>
    %205 = vector.shape_cast %204 : vector<1x8x32xf32> to vector<8x32xf32>
    %206 = vector.shape_cast %203 : vector<8x32xf32> to vector<1x8x32xf32>
    tpu.vector_store %arg22[%c0_76, %c0_77, %c0_78], %206 {strides = array<i32>} : memref<1x8x32xf32, #tpu.memory_space<vmem>>, vector<1x8x32xf32>,
    return
  }
  func.func @transform_0(%arg0: i32, %arg1: i32) -> (i32, i32, i32) {
    %c0_i32 = arith.constant 0 : i32
    %c0_i32_0 = arith.constant 0 : i32
    return %arg0, %arg1, %c0_i32 : i32, i32, i32
  }
  func.func @transform_1(%arg0: i32, %arg1: i32) -> (i32, i32, i32) {
    %c0_i32 = arith.constant 0 : i32
    %c0_i32_0 = arith.constant 0 : i32
    %c0_i32_1 = arith.constant 0 : i32
    return %arg0, %c0_i32, %c0_i32_0 : i32, i32, i32
  }
  func.func @transform_2(%arg0: i32, %arg1: i32) -> (i32, i32, i32) {
    %c0_i32 = arith.constant 0 : i32
    %c0_i32_0 = arith.constant 0 : i32
    %c0_i32_1 = arith.constant 0 : i32
    return %arg0, %c0_i32, %c0_i32_0 : i32, i32, i32
  }
  func.func @transform_3(%arg0: i32, %arg1: i32) -> (i32, i32) {
    %c0_i32 = arith.constant 0 : i32
    %c0_i32_0 = arith.constant 0 : i32
    %c0_i32_1 = arith.constant 0 : i32
    return %c0_i32, %c0_i32_0 : i32, i32
  }
  func.func @transform_4(%arg0: i32, %arg1: i32) -> (i32, i32) {
    %c0_i32 = arith.constant 0 : i32
    %c0_i32_0 = arith.constant 0 : i32
    %c0_i32_1 = arith.constant 0 : i32
    return %c0_i32, %c0_i32_0 : i32, i32
  }
  func.func @transform_5(%arg0: i32, %arg1: i32) -> (i32, i32) {
    %c0_i32 = arith.constant 0 : i32
    %c0_i32_0 = arith.constant 0 : i32
    %c0_i32_1 = arith.constant 0 : i32
    return %c0_i32, %c0_i32_0 : i32, i32
  }
  func.func @transform_6(%arg0: i32, %arg1: i32) -> (i32, i32) {
    %c0_i32 = arith.constant 0 : i32
    %c0_i32_0 = arith.constant 0 : i32
    %c0_i32_1 = arith.constant 0 : i32
    return %c0_i32, %c0_i32_0 : i32, i32
  }
  func.func @transform_7(%arg0: i32, %arg1: i32) -> (i32, i32) {
    %c0_i32 = arith.constant 0 : i32
    %c0_i32_0 = arith.constant 0 : i32
    %c0_i32_1 = arith.constant 0 : i32
    return %c0_i32, %c0_i32_0 : i32, i32
  }
  func.func @transform_8(%arg0: i32, %arg1: i32) -> (i32, i32) {
    %c0_i32 = arith.constant 0 : i32
    %c0_i32_0 = arith.constant 0 : i32
    %c0_i32_1 = arith.constant 0 : i32
    return %c0_i32, %c0_i32_0 : i32, i32
  }
  func.func @transform_9(%arg0: i32, %arg1: i32) -> (i32, i32) {
    %c0_i32 = arith.constant 0 : i32
    %c0_i32_0 = arith.constant 0 : i32
    %c0_i32_1 = arith.constant 0 : i32
    return %c0_i32, %c0_i32_0 : i32, i32
  }
  func.func @transform_10(%arg0: i32, %arg1: i32) -> (i32, i32) {
    %c0_i32 = arith.constant 0 : i32
    %c0_i32_0 = arith.constant 0 : i32
    %c0_i32_1 = arith.constant 0 : i32
    return %c0_i32, %c0_i32_0 : i32, i32
  }
  func.func @transform_11(%arg0: i32, %arg1: i32) -> (i32, i32, i32) {
    %c0_i32 = arith.constant 0 : i32
    %c0_i32_0 = arith.constant 0 : i32
    %c0_i32_1 = arith.constant 0 : i32
    %c0_i32_2 = arith.constant 0 : i32
    return %c0_i32, %c0_i32_0, %c0_i32_1 : i32, i32, i32
  }
  func.func @transform_12(%arg0: i32, %arg1: i32) -> (i32, i32) {
    %c0_i32 = arith.constant 0 : i32
    %c0_i32_0 = arith.constant 0 : i32
    %c0_i32_1 = arith.constant 0 : i32
    return %c0_i32, %c0_i32_0 : i32, i32
  }
  func.func @transform_13(%arg0: i32, %arg1: i32) -> (i32, i32) {
    %c0_i32 = arith.constant 0 : i32
    %c0_i32_0 = arith.constant 0 : i32
    %c0_i32_1 = arith.constant 0 : i32
    return %c0_i32, %c0_i32_0 : i32, i32
  }
  func.func @transform_14(%arg0: i32, %arg1: i32) -> (i32, i32) {
    %c0_i32 = arith.constant 0 : i32
    %c0_i32_0 = arith.constant 0 : i32
    %c0_i32_1 = arith.constant 0 : i32
    return %c0_i32, %c0_i32_0 : i32, i32
  }
  func.func @transform_15(%arg0: i32, %arg1: i32) -> (i32, i32) {
    %c0_i32 = arith.constant 0 : i32
    %c0_i32_0 = arith.constant 0 : i32
    %c0_i32_1 = arith.constant 0 : i32
    return %c0_i32, %c0_i32_0 : i32, i32
  }
  func.func @transform_16(%arg0: i32, %arg1: i32) -> (i32, i32) {
    %c0_i32 = arith.constant 0 : i32
    %c0_i32_0 = arith.constant 0 : i32
    %c0_i32_1 = arith.constant 0 : i32
    return %c0_i32, %c0_i32_0 : i32, i32
  }
  func.func @transform_17(%arg0: i32, %arg1: i32) -> (i32, i32) {
    %c0_i32 = arith.constant 0 : i32
    %c0_i32_0 = arith.constant 0 : i32
    %c0_i32_1 = arith.constant 0 : i32
    return %c0_i32, %c0_i32_0 : i32, i32
  }
  func.func @transform_18(%arg0: i32, %arg1: i32) -> (i32, i32) {
    %c0_i32 = arith.constant 0 : i32
    %c0_i32_0 = arith.constant 0 : i32
    %c0_i32_1 = arith.constant 0 : i32
    return %c0_i32, %c0_i32_0 : i32, i32
  }
  func.func @transform_19(%arg0: i32, %arg1: i32) -> (i32, i32) {
    %c0_i32 = arith.constant 0 : i32
    %c0_i32_0 = arith.constant 0 : i32
    %c0_i32_1 = arith.constant 0 : i32
    return %c0_i32, %c0_i32_0 : i32, i32
  }
  func.func @transform_20(%arg0: i32, %arg1: i32) -> (i32, i32, i32) {
    %c0_i32 = arith.constant 0 : i32
    %c0_i32_0 = arith.constant 0 : i32
    return %arg0, %arg1, %c0_i32 : i32, i32, i32
  }
}

</mosaic_0001>

<llo_original>
// kernel: tpu_custom_call.1
$region0: #{tpu_custom_call.1}
  #allocation0 [shape = 'u32[]', space=smem, size = 0x4, offset = 0x4, fixed_abs, tag = 'smem constant byte address 0x4 - core index']
  #allocation1 [shape = 'u32[144,128]{1,0:T(1,128)}', space=vmem, size = 0x12000, scoped, tag = 'internal scratch']
  %s0 = inlined_call_operand.hbm [shape: f32[2,8,32], index: 0, kind: input, shape index: {}]
  %s1 = inlined_call_operand.hbm [shape: f32[2,8,32], index: 1, kind: input, shape index: {}]
  %s2 = inlined_call_operand.hbm [shape: f32[2,8,32], index: 2, kind: input, shape index: {}]
  %s3 = inlined_call_operand.vmem [shape: f32[32,32], index: 3, kind: input, shape index: {}]
  %s4 = inlined_call_operand.vmem [shape: f32[1,32], index: 4, kind: input, shape index: {}]
  %s5 = inlined_call_operand.vmem [shape: f32[32,32], index: 5, kind: input, shape index: {}]
  %s6 = inlined_call_operand.vmem [shape: f32[1,32], index: 6, kind: input, shape index: {}]
  %s7 = inlined_call_operand.vmem [shape: f32[32,32], index: 7, kind: input, shape index: {}]
  %s8 = inlined_call_operand.hbm [shape: f32[1,32], index: 8, kind: input, shape index: {}]
  %s9 = inlined_call_operand.hbm [shape: f32[32,32], index: 9, kind: input, shape index: {}]
  %s10 = inlined_call_operand.hbm [shape: f32[1,32], index: 10, kind: input, shape index: {}]
  %s11 = inlined_call_operand.vmem [shape: f32[4,1,1], index: 11, kind: input, shape index: {}]
  %s12 = inlined_call_operand.hbm [shape: f32[1,32], index: 12, kind: input, shape index: {}]
  %s13 = inlined_call_operand.hbm [shape: f32[1,32], index: 13, kind: input, shape index: {}]
  %s14 = inlined_call_operand.hbm [shape: f32[32,64], index: 14, kind: input, shape index: {}]
  %s15 = inlined_call_operand.hbm [shape: f32[1,64], index: 15, kind: input, shape index: {}]
  %s16 = inlined_call_operand.vmem [shape: f32[64,32], index: 16, kind: input, shape index: {}]
  %s17 = inlined_call_operand.vmem [shape: f32[1,32], index: 17, kind: input, shape index: {}]
  %s18 = inlined_call_operand.vmem [shape: f32[1,32], index: 18, kind: input, shape index: {}]
  %s19 = inlined_call_operand.vmem [shape: f32[1,32], index: 19, kind: input, shape index: {}]
  %s20 = inlined_call_operand.hbm [shape: f32[2,8,32], index: 20, kind: output, shape index: {}]
  %s21 = sld [smem:[#allocation0]]
  $region153: #{tpu_custom_call.1} parent=0
    _
  %s23 = ssub.s32 1, %s21
  %s24 = scalar_select 0, %s23, %s21
  $region1: #{tpu_custom_call.1} parent=0
    #allocation2 [shape = 'u8[8192]{0}', space=vmem, size = 0x2000, scoped, tag = 'input window, operand 0']
    #allocation3 [shape = 's32[2]{0}', space=sflag, size = 0x8, scoped, tag = 'scoped memory for tpu_custom_call.1']
    #allocation4 [shape = 's32[2]{0}', space=sflag, size = 0x8, scoped, tag = 'scoped memory for tpu_custom_call.1']
    #allocation5 [shape = 'u8[8192]{0}', space=vmem, size = 0x2000, scoped, tag = 'input window, operand 1']
    #allocation6 [shape = 's32[2]{0}', space=sflag, size = 0x8, scoped, tag = 'scoped memory for tpu_custom_call.1']
    #allocation7 [shape = 'u8[8192]{0}', space=vmem, size = 0x2000, scoped, tag = 'input window, operand 2']
    #allocation8 [shape = 'u8[512]{0}', space=vmem, size = 0x400, scoped, tag = 'input window, operand 8, single buffered']
    #allocation9 [shape = 's32[1]{0}', space=sflag, size = 0x4, scoped, tag = 'scoped memory for tpu_custom_call.1']
    #allocation10 [shape = 'u8[16384]{0}', space=vmem, size = 0x4000, scoped, tag = 'input window, operand 9, single buffered']
    #allocation11 [shape = 'u8[512]{0}', space=vmem, size = 0x400, scoped, tag = 'input window, operand 10, single buffered']
    #allocation12 [shape = 's32[1]{0}', space=sflag, size = 0x4, scoped, tag = 'scoped memory for tpu_custom_call.1']
    #allocation13 [shape = 'u8[512]{0}', space=vmem, size = 0x400, scoped, tag = 'input window, operand 12, single buffered']
    #allocation14 [shape = 'u8[512]{0}', space=vmem, size = 0x400, scoped, tag = 'input window, operand 13, single buffered']
    #allocation15 [shape = 's32[1]{0}', space=sflag, size = 0x4, scoped, tag = 'scoped memory for tpu_custom_call.1']
    #allocation16 [shape = 'u8[16384]{0}', space=vmem, size = 0x4000, scoped, tag = 'input window, operand 14, single buffered']
    #allocation17 [shape = 'u8[512]{0}', space=vmem, size = 0x400, scoped, tag = 'input window, operand 15, single buffered']
    #allocation18 [shape = 's32[1]{0}', space=sflag, size = 0x4, scoped, tag = 'scoped memory for tpu_custom_call.1']
    #allocation19 [shape = 'u8[8192]{0}', space=vmem, size = 0x2000, scoped, tag = 'output window, operand 0']
    %25 = vsyncpa [#allocation3], 0
    %s26 = scalar_lea.sflag [#allocation3], 1
    %27 = vsyncpa %s26, 0
    %28 = vsyncpa [#allocation6], 0
    %s29 = scalar_lea.sflag [#allocation6], 1
    %30 = vsyncpa %s29, 0
    %31 = vsyncpa [#allocation9], 0
    %32 = vsyncpa [#allocation12], 0
    %33 = vsyncpa [#allocation15], 0
    %34 = vsyncpa [#allocation18], 0
    %35 = vsyncpa [#allocation4], 0
    %s36 = scalar_lea.sflag [#allocation4], 1
    %37 = vsyncpa %s36, 0
    loop: start=0, step=1, limit=4
    $region2: #{tpu_custom_call.1} parent=1 // loop_pre_header
      _
    $region3: #{tpu_custom_call.1} parent=1 // loop_header
      %s39 = sphi 0, %s43
      %p40 = scmp.ge.s32.totalorder %s39, 4
      %s46 = sphi 0, %s58
      %s47 = sphi 0, %s54
      %s48 = sphi 0, %s46
      %s49 = sphi 0, %s47
      %s50 = sphi 0, %s48
      %s51 = sphi 0, %s49
      %s63 = sphi 0, %s65
      %s66 = sphi 0, %s63
      %s67 = sphi 0, %s66
      %s83 = sphi 0, %s67
      %s89 = sphi 0, %s91
      %s92 = sphi 0, %s89
      %s93 = sphi 0, %s92
      %s109 = sphi 0, %s93
      %s115 = sphi 0, %s117
      %s118 = sphi 0, %s115
      %s119 = sphi 0, %s118
      %s135 = sphi 0, %s119
      %s139 = sphi 0, %s139
      %s141 = sphi 0, %s139
      %s142 = sphi 0, %s141
      %s156 = sphi 0, %s142
      %s160 = sphi 0, %s160
      %s162 = sphi 0, %s160
      %s163 = sphi 0, %s162
      %s177 = sphi 0, %s163
      %s181 = sphi 0, %s181
      %s183 = sphi 0, %s181
      %s184 = sphi 0, %s183
      %s198 = sphi 0, %s184
      %s202 = sphi 0, %s202
      %s204 = sphi 0, %s202
      %s205 = sphi 0, %s204
      %s219 = sphi 0, %s205
      %s223 = sphi 0, %s223
      %s225 = sphi 0, %s223
      %s226 = sphi 0, %s225
      %s240 = sphi 0, %s226
      %s244 = sphi 0, %s244
      %s246 = sphi 0, %s244
      %s247 = sphi 0, %s246
      %s261 = sphi 0, %s247
      %s265 = sphi 0, %s265
      %s267 = sphi 0, %s265
      %s268 = sphi 0, %s267
      %s282 = sphi 0, %s268
      %s286 = sphi 0, %s286
      %s288 = sphi 0, %s286
      %s289 = sphi 0, %s288
      %s303 = sphi 0, %s289
      %s307 = sphi 0, %s307
      %s309 = sphi 0, %s307
      %s310 = sphi 0, %s309
      %s324 = sphi 0, %s310
      %s328 = sphi 0, %s328
      %s330 = sphi 0, %s328
      %s331 = sphi 0, %s330
      %s345 = sphi 0, %s331
      %s349 = sphi 0, %s349
      %s351 = sphi 0, %s349
      %s352 = sphi 0, %s351
      %s366 = sphi 0, %s352
      %s370 = sphi 0, %s370
      %s372 = sphi 0, %s370
      %s373 = sphi 0, %s372
      %s387 = sphi 0, %s373
      %s391 = sphi 0, %s391
      %s393 = sphi 0, %s391
      %s394 = sphi 0, %s393
      %s408 = sphi 0, %s394
      %s412 = sphi 0, %s412
      %s414 = sphi 0, %s412
      %s415 = sphi 0, %s414
      %s429 = sphi 0, %s415
      %s433 = sphi 0, %s433
      %s435 = sphi 0, %s433
      %s436 = sphi 0, %s435
      %s450 = sphi 0, %s436
      %s454 = sphi 0, %s454
      %s456 = sphi 0, %s454
      %s457 = sphi 0, %s456
      %s471 = sphi 0, %s457
      %s475 = sphi 0, %s475
      %s477 = sphi 0, %s475
      %s478 = sphi 0, %s477
      %s492 = sphi 0, %s478
      %s500 = sphi 0, %s502
      %s503 = sphi 0, %s500
      %s504 = sphi 0, %s503
      %s520 = sphi 0, %s504
    $region4: #{tpu_custom_call.1} parent=1 // loop_header_branch
      %42 = sbr.rel (%p40) target = $region8
    $region5: #{tpu_custom_call.1} parent=1 // loop_body
      %s44 = ssub.s32 %s39, 1
      %s45 = ssub.s32 %s39, 2
      %s52 = sadd.s32 1, %s47
      %p53 = scmp.ge.s32.totalorder %s52, 1
      %s54 = scalar_select %p53, 0, %s52
      %s55 = sadd.s32 1, %s46
      %s56 = scalar_select %p53, %s55, %s46
      %p57 = scmp.ge.s32.totalorder %s56, 2
      %s58 = scalar_select %p57, 0, %s56
      %s59 = ssub.s32 %s46, %s58
      %s60 = ssub.s32 %s47, %s54
      %s61 = sor.u32 %s59, %s60
      %p62 = scmp.eq.s32.totalorder %s61, 0
      %s64 = sadd.s32 %s63, 1
      %s65 = scalar_select %p62, %s63, %s64
      %p68 = pneg %p62
      %p69 = scmp.eq.s32.totalorder %s39, 1
      %p70 = por %p68, %p69
      %p71 = scmp.ne.s32.totalorder %s63, %s66
      %p72 = scmp.eq.s32.totalorder %s39, 0
      %p73 = por %p71, %p72
      %p74 = scmp.ne.s32.totalorder %s63, %s66
      %p75 = scmp.eq.s32.totalorder %s44, 1
      %p76 = por %p74, %p75
      %p77 = scmp.ne.s32.totalorder %s66, %s67
      %p78 = scmp.eq.s32.totalorder %s44, 0
      %p79 = por %p77, %p78
      %p80 = scmp.ne.s32.totalorder %s66, %s67
      %p81 = scmp.eq.s32.totalorder %s45, 1
      %p82 = por %p80, %p81
      %p84 = scmp.ne.s32.totalorder %s67, %s83
      %p85 = scmp.eq.s32.totalorder %s45, 0
      %p86 = por %p84, %p85
      %s87 = ssub.s32 %s46, %s58
      %p88 = scmp.eq.s32.totalorder %s87, 0
      %s90 = sadd.s32 %s89, 1
      %s91 = scalar_select %p88, %s89, %s90
      %p94 = pneg %p88
      %p95 = scmp.eq.s32.totalorder %s39, 1
      %p96 = por %p94, %p95
      %p97 = scmp.ne.s32.totalorder %s89, %s92
      %p98 = scmp.eq.s32.totalorder %s39, 0
      %p99 = por %p97, %p98
      %p100 = scmp.ne.s32.totalorder %s89, %s92
      %p101 = scmp.eq.s32.totalorder %s44, 1
      %p102 = por %p100, %p101
      %p103 = scmp.ne.s32.totalorder %s92, %s93
      %p104 = scmp.eq.s32.totalorder %s44, 0
      %p105 = por %p103, %p104
      %p106 = scmp.ne.s32.totalorder %s92, %s93
      %p107 = scmp.eq.s32.totalorder %s45, 1
      %p108 = por %p106, %p107
      %p110 = scmp.ne.s32.totalorder %s93, %s109
      %p111 = scmp.eq.s32.totalorder %s45, 0
      %p112 = por %p110, %p111
      %s113 = ssub.s32 %s46, %s58
      %p114 = scmp.eq.s32.totalorder %s113, 0
      %s116 = sadd.s32 %s115, 1
      %s117 = scalar_select %p114, %s115, %s116
      %p120 = pneg %p114
      %p121 = scmp.eq.s32.totalorder %s39, 1
      %p122 = por %p120, %p121
      %p123 = scmp.ne.s32.totalorder %s115, %s118
      %p124 = scmp.eq.s32.totalorder %s39, 0
      %p125 = por %p123, %p124
      %p126 = scmp.ne.s32.totalorder %s115, %s118
      %p127 = scmp.eq.s32.totalorder %s44, 1
      %p128 = por %p126, %p127
      %p129 = scmp.ne.s32.totalorder %s118, %s119
      %p130 = scmp.eq.s32.totalorder %s44, 0
      %p131 = por %p129, %p130
      %p132 = scmp.ne.s32.totalorder %s118, %s119
      %p133 = scmp.eq.s32.totalorder %s45, 1
      %p134 = por %p132, %p133
      %p136 = scmp.ne.s32.totalorder %s119, %s135
      %p137 = scmp.eq.s32.totalorder %s45, 0
      %p138 = por %p136, %p137
      %s140 = sadd.s32 %s139, 1
      %p143 = scmp.eq.s32.totalorder %s39, 1
      %p144 = scmp.ne.s32.totalorder %s139, %s141
      %p145 = scmp.eq.s32.totalorder %s39, 0
      %p146 = por %p144, %p145
      %p147 = scmp.ne.s32.totalorder %s139, %s141
      %p148 = scmp.eq.s32.totalorder %s44, 1
      %p149 = por %p147, %p148
      %p150 = scmp.ne.s32.totalorder %s141, %s142
      %p151 = scmp.eq.s32.totalorder %s44, 0
      %p152 = por %p150, %p151
      %p153 = scmp.ne.s32.totalorder %s141, %s142
      %p154 = scmp.eq.s32.totalorder %s45, 1
      %p155 = por %p153, %p154
      %p157 = scmp.ne.s32.totalorder %s142, %s156
      %p158 = scmp.eq.s32.totalorder %s45, 0
      %p159 = por %p157, %p158
      %s161 = sadd.s32 %s160, 1
      %p164 = scmp.eq.s32.totalorder %s39, 1
      %p165 = scmp.ne.s32.totalorder %s160, %s162
      %p166 = scmp.eq.s32.totalorder %s39, 0
      %p167 = por %p165, %p166
      %p168 = scmp.ne.s32.totalorder %s160, %s162
      %p169 = scmp.eq.s32.totalorder %s44, 1
      %p170 = por %p168, %p169
      %p171 = scmp.ne.s32.totalorder %s162, %s163
      %p172 = scmp.eq.s32.totalorder %s44, 0
      %p173 = por %p171, %p172
      %p174 = scmp.ne.s32.totalorder %s162, %s163
      %p175 = scmp.eq.s32.totalorder %s45, 1
      %p176 = por %p174, %p175
      %p178 = scmp.ne.s32.totalorder %s163, %s177
      %p179 = scmp.eq.s32.totalorder %s45, 0
      %p180 = por %p178, %p179
      %s182 = sadd.s32 %s181, 1
      %p185 = scmp.eq.s32.totalorder %s39, 1
      %p186 = scmp.ne.s32.totalorder %s181, %s183
      %p187 = scmp.eq.s32.totalorder %s39, 0
      %p188 = por %p186, %p187
      %p189 = scmp.ne.s32.totalorder %s181, %s183
      %p190 = scmp.eq.s32.totalorder %s44, 1
      %p191 = por %p189, %p190
      %p192 = scmp.ne.s32.totalorder %s183, %s184
      %p193 = scmp.eq.s32.totalorder %s44, 0
      %p194 = por %p192, %p193
      %p195 = scmp.ne.s32.totalorder %s183, %s184
      %p196 = scmp.eq.s32.totalorder %s45, 1
      %p197 = por %p195, %p196
      %p199 = scmp.ne.s32.totalorder %s184, %s198
      %p200 = scmp.eq.s32.totalorder %s45, 0
      %p201 = por %p199, %p200
      %s203 = sadd.s32 %s202, 1
      %p206 = scmp.eq.s32.totalorder %s39, 1
      %p207 = scmp.ne.s32.totalorder %s202, %s204
      %p208 = scmp.eq.s32.totalorder %s39, 0
      %p209 = por %p207, %p208
      %p210 = scmp.ne.s32.totalorder %s202, %s204
      %p211 = scmp.eq.s32.totalorder %s44, 1
      %p212 = por %p210, %p211
      %p213 = scmp.ne.s32.totalorder %s204, %s205
      %p214 = scmp.eq.s32.totalorder %s44, 0
      %p215 = por %p213, %p214
      %p216 = scmp.ne.s32.totalorder %s204, %s205
      %p217 = scmp.eq.s32.totalorder %s45, 1
      %p218 = por %p216, %p217
      %p220 = scmp.ne.s32.totalorder %s205, %s219
      %p221 = scmp.eq.s32.totalorder %s45, 0
      %p222 = por %p220, %p221
      %s224 = sadd.s32 %s223, 1
      %p227 = scmp.eq.s32.totalorder %s39, 1
      %p228 = scmp.ne.s32.totalorder %s223, %s225
      %p229 = scmp.eq.s32.totalorder %s39, 0
      %p230 = por %p228, %p229
      %p231 = scmp.ne.s32.totalorder %s223, %s225
      %p232 = scmp.eq.s32.totalorder %s44, 1
      %p233 = por %p231, %p232
      %p234 = scmp.ne.s32.totalorder %s225, %s226
      %p235 = scmp.eq.s32.totalorder %s44, 0
      %p236 = por %p234, %p235
      %p237 = scmp.ne.s32.totalorder %s225, %s226
      %p238 = scmp.eq.s32.totalorder %s45, 1
      %p239 = por %p237, %p238
      %p241 = scmp.ne.s32.totalorder %s226, %s240
      %p242 = scmp.eq.s32.totalorder %s45, 0
      %p243 = por %p241, %p242
      %s245 = sadd.s32 %s244, 1
      %p248 = scmp.eq.s32.totalorder %s39, 1
      %p249 = scmp.ne.s32.totalorder %s244, %s246
      %p250 = scmp.eq.s32.totalorder %s39, 0
      %p251 = por %p249, %p250
      %p252 = scmp.ne.s32.totalorder %s244, %s246
      %p253 = scmp.eq.s32.totalorder %s44, 1
      %p254 = por %p252, %p253
      %p255 = scmp.ne.s32.totalorder %s246, %s247
      %p256 = scmp.eq.s32.totalorder %s44, 0
      %p257 = por %p255, %p256
      %p258 = scmp.ne.s32.totalorder %s246, %s247
      %p259 = scmp.eq.s32.totalorder %s45, 1
      %p260 = por %p258, %p259
      %p262 = scmp.ne.s32.totalorder %s247, %s261
      %p263 = scmp.eq.s32.totalorder %s45, 0
      %p264 = por %p262, %p263
      %s266 = sadd.s32 %s265, 1
      %p269 = scmp.eq.s32.totalorder %s39, 1
      %p270 = scmp.ne.s32.totalorder %s265, %s267
      %p271 = scmp.eq.s32.totalorder %s39, 0
      %p272 = por %p270, %p271
      %p273 = scmp.ne.s32.totalorder %s265, %s267
      %p274 = scmp.eq.s32.totalorder %s44, 1
      %p275 = por %p273, %p274
      %p276 = scmp.ne.s32.totalorder %s267, %s268
      %p277 = scmp.eq.s32.totalorder %s44, 0
      %p278 = por %p276, %p277
      %p279 = scmp.ne.s32.totalorder %s267, %s268
      %p280 = scmp.eq.s32.totalorder %s45, 1
      %p281 = por %p279, %p280
      %p283 = scmp.ne.s32.totalorder %s268, %s282
      %p284 = scmp.eq.s32.totalorder %s45, 0
      %p285 = por %p283, %p284
      %s287 = sadd.s32 %s286, 1
      %p290 = scmp.eq.s32.totalorder %s39, 1
      %p291 = scmp.ne.s32.totalorder %s286, %s288
      %p292 = scmp.eq.s32.totalorder %s39, 0
      %p293 = por %p291, %p292
      %p294 = scmp.ne.s32.totalorder %s286, %s288
      %p295 = scmp.eq.s32.totalorder %s44, 1
      %p296 = por %p294, %p295
      %p297 = scmp.ne.s32.totalorder %s288, %s289
      %p298 = scmp.eq.s32.totalorder %s44, 0
      %p299 = por %p297, %p298
      %p300 = scmp.ne.s32.totalorder %s288, %s289
      %p301 = scmp.eq.s32.totalorder %s45, 1
      %p302 = por %p300, %p301
      %p304 = scmp.ne.s32.totalorder %s289, %s303
      %p305 = scmp.eq.s32.totalorder %s45, 0
      %p306 = por %p304, %p305
      %s308 = sadd.s32 %s307, 1
      %p311 = scmp.eq.s32.totalorder %s39, 1
      %p312 = scmp.ne.s32.totalorder %s307, %s309
      %p313 = scmp.eq.s32.totalorder %s39, 0
      %p314 = por %p312, %p313
      %p315 = scmp.ne.s32.totalorder %s307, %s309
      %p316 = scmp.eq.s32.totalorder %s44, 1
      %p317 = por %p315, %p316
      %p318 = scmp.ne.s32.totalorder %s309, %s310
      %p319 = scmp.eq.s32.totalorder %s44, 0
      %p320 = por %p318, %p319
      %p321 = scmp.ne.s32.totalorder %s309, %s310
      %p322 = scmp.eq.s32.totalorder %s45, 1
      %p323 = por %p321, %p322
      %p325 = scmp.ne.s32.totalorder %s310, %s324
      %p326 = scmp.eq.s32.totalorder %s45, 0
      %p327 = por %p325, %p326
      %s329 = sadd.s32 %s328, 1
      %p332 = scmp.eq.s32.totalorder %s39, 1
      %p333 = scmp.ne.s32.totalorder %s328, %s330
      %p334 = scmp.eq.s32.totalorder %s39, 0
      %p335 = por %p333, %p334
      %p336 = scmp.ne.s32.totalorder %s328, %s330
      %p337 = scmp.eq.s32.totalorder %s44, 1
      %p338 = por %p336, %p337
      %p339 = scmp.ne.s32.totalorder %s330, %s331
      %p340 = scmp.eq.s32.totalorder %s44, 0
      %p341 = por %p339, %p340
      %p342 = scmp.ne.s32.totalorder %s330, %s331
      %p343 = scmp.eq.s32.totalorder %s45, 1
      %p344 = por %p342, %p343
      %p346 = scmp.ne.s32.totalorder %s331, %s345
      %p347 = scmp.eq.s32.totalorder %s45, 0
      %p348 = por %p346, %p347
      %s350 = sadd.s32 %s349, 1
      %p353 = scmp.eq.s32.totalorder %s39, 1
      %p354 = scmp.ne.s32.totalorder %s349, %s351
      %p355 = scmp.eq.s32.totalorder %s39, 0
      %p356 = por %p354, %p355
      %p357 = scmp.ne.s32.totalorder %s349, %s351
      %p358 = scmp.eq.s32.totalorder %s44, 1
      %p359 = por %p357, %p358
      %p360 = scmp.ne.s32.totalorder %s351, %s352
      %p361 = scmp.eq.s32.totalorder %s44, 0
      %p362 = por %p360, %p361
      %p363 = scmp.ne.s32.totalorder %s351, %s352
      %p364 = scmp.eq.s32.totalorder %s45, 1
      %p365 = por %p363, %p364
      %p367 = scmp.ne.s32.totalorder %s352, %s366
      %p368 = scmp.eq.s32.totalorder %s45, 0
      %p369 = por %p367, %p368
      %s371 = sadd.s32 %s370, 1
      %p374 = scmp.eq.s32.totalorder %s39, 1
      %p375 = scmp.ne.s32.totalorder %s370, %s372
      %p376 = scmp.eq.s32.totalorder %s39, 0
      %p377 = por %p375, %p376
      %p378 = scmp.ne.s32.totalorder %s370, %s372
      %p379 = scmp.eq.s32.totalorder %s44, 1
      %p380 = por %p378, %p379
      %p381 = scmp.ne.s32.totalorder %s372, %s373
      %p382 = scmp.eq.s32.totalorder %s44, 0
      %p383 = por %p381, %p382
      %p384 = scmp.ne.s32.totalorder %s372, %s373
      %p385 = scmp.eq.s32.totalorder %s45, 1
      %p386 = por %p384, %p385
      %p388 = scmp.ne.s32.totalorder %s373, %s387
      %p389 = scmp.eq.s32.totalorder %s45, 0
      %p390 = por %p388, %p389
      %s392 = sadd.s32 %s391, 1
      %p395 = scmp.eq.s32.totalorder %s39, 1
      %p396 = scmp.ne.s32.totalorder %s391, %s393
      %p397 = scmp.eq.s32.totalorder %s39, 0
      %p398 = por %p396, %p397
      %p399 = scmp.ne.s32.totalorder %s391, %s393
      %p400 = scmp.eq.s32.totalorder %s44, 1
      %p401 = por %p399, %p400
      %p402 = scmp.ne.s32.totalorder %s393, %s394
      %p403 = scmp.eq.s32.totalorder %s44, 0
      %p404 = por %p402, %p403
      %p405 = scmp.ne.s32.totalorder %s393, %s394
      %p406 = scmp.eq.s32.totalorder %s45, 1
      %p407 = por %p405, %p406
      %p409 = scmp.ne.s32.totalorder %s394, %s408
      %p410 = scmp.eq.s32.totalorder %s45, 0
      %p411 = por %p409, %p410
      %s413 = sadd.s32 %s412, 1
      %p416 = scmp.eq.s32.totalorder %s39, 1
      %p417 = scmp.ne.s32.totalorder %s412, %s414
      %p418 = scmp.eq.s32.totalorder %s39, 0
      %p419 = por %p417, %p418
      %p420 = scmp.ne.s32.totalorder %s412, %s414
      %p421 = scmp.eq.s32.totalorder %s44, 1
      %p422 = por %p420, %p421
      %p423 = scmp.ne.s32.totalorder %s414, %s415
      %p424 = scmp.eq.s32.totalorder %s44, 0
      %p425 = por %p423, %p424
      %p426 = scmp.ne.s32.totalorder %s414, %s415
      %p427 = scmp.eq.s32.totalorder %s45, 1
      %p428 = por %p426, %p427
      %p430 = scmp.ne.s32.totalorder %s415, %s429
      %p431 = scmp.eq.s32.totalorder %s45, 0
      %p432 = por %p430, %p431
      %s434 = sadd.s32 %s433, 1
      %p437 = scmp.eq.s32.totalorder %s39, 1
      %p438 = scmp.ne.s32.totalorder %s433, %s435
      %p439 = scmp.eq.s32.totalorder %s39, 0
      %p440 = por %p438, %p439
      %p441 = scmp.ne.s32.totalorder %s433, %s435
      %p442 = scmp.eq.s32.totalorder %s44, 1
      %p443 = por %p441, %p442
      %p444 = scmp.ne.s32.totalorder %s435, %s436
      %p445 = scmp.eq.s32.totalorder %s44, 0
      %p446 = por %p444, %p445
      %p447 = scmp.ne.s32.totalorder %s435, %s436
      %p448 = scmp.eq.s32.totalorder %s45, 1
      %p449 = por %p447, %p448
      %p451 = scmp.ne.s32.totalorder %s436, %s450
      %p452 = scmp.eq.s32.totalorder %s45, 0
      %p453 = por %p451, %p452
      %s455 = sadd.s32 %s454, 1
      %p458 = scmp.eq.s32.totalorder %s39, 1
      %p459 = scmp.ne.s32.totalorder %s454, %s456
      %p460 = scmp.eq.s32.totalorder %s39, 0
      %p461 = por %p459, %p460
      %p462 = scmp.ne.s32.totalorder %s454, %s456
      %p463 = scmp.eq.s32.totalorder %s44, 1
      %p464 = por %p462, %p463
      %p465 = scmp.ne.s32.totalorder %s456, %s457
      %p466 = scmp.eq.s32.totalorder %s44, 0
      %p467 = por %p465, %p466
      %p468 = scmp.ne.s32.totalorder %s456, %s457
      %p469 = scmp.eq.s32.totalorder %s45, 1
      %p470 = por %p468, %p469
      %p472 = scmp.ne.s32.totalorder %s457, %s471
      %p473 = scmp.eq.s32.totalorder %s45, 0
      %p474 = por %p472, %p473
      %s476 = sadd.s32 %s475, 1
      %p479 = scmp.eq.s32.totalorder %s39, 1
      %p480 = scmp.ne.s32.totalorder %s475, %s477
      %p481 = scmp.eq.s32.totalorder %s39, 0
      %p482 = por %p480, %p481
      %p483 = scmp.ne.s32.totalorder %s475, %s477
      %p484 = scmp.eq.s32.totalorder %s44, 1
      %p485 = por %p483, %p484
      %p486 = scmp.ne.s32.totalorder %s477, %s478
      %p487 = scmp.eq.s32.totalorder %s44, 0
      %p488 = por %p486, %p487
      %p489 = scmp.ne.s32.totalorder %s477, %s478
      %p490 = scmp.eq.s32.totalorder %s45, 1
      %p491 = por %p489, %p490
      %p493 = scmp.ne.s32.totalorder %s478, %s492
      %p494 = scmp.eq.s32.totalorder %s45, 0
      %p495 = por %p493, %p494
      %s496 = ssub.s32 %s46, %s58
      %s497 = ssub.s32 %s47, %s54
      %s498 = sor.u32 %s496, %s497
      %p499 = scmp.eq.s32.totalorder %s498, 0
      %s501 = sadd.s32 %s500, 1
      %s502 = scalar_select %p499, %s500, %s501
      %p505 = pneg %p499
      %p506 = scmp.eq.s32.totalorder %s39, 1
      %p507 = por %p505, %p506
      %p508 = scmp.ne.s32.totalorder %s500, %s503
      %p509 = scmp.eq.s32.totalorder %s39, 0
      %p510 = por %p508, %p509
      %p511 = scmp.ne.s32.totalorder %s500, %s503
      %p512 = scmp.eq.s32.totalorder %s44, 1
      %p513 = por %p511, %p512
      %p514 = scmp.ne.s32.totalorder %s503, %s504
      %p515 = scmp.eq.s32.totalorder %s44, 0
      %p516 = por %p514, %p515
      %p517 = scmp.ne.s32.totalorder %s503, %s504
      %p518 = scmp.eq.s32.totalorder %s45, 1
      %p519 = por %p517, %p518
      %p521 = scmp.ne.s32.totalorder %s504, %s520
      %p522 = scmp.eq.s32.totalorder %s45, 0
      %p523 = por %p521, %p522
      %p524 = scmp.le.s32.totalorder 1, %s39
      %p525 = scmp.lt.s32.totalorder %s39, 3
      %p526 = pnand %p524, %p525
      %p527 = pneg %p526
      // Predicated region
      $region9: #{tpu_custom_call.1} parent=5 // pred_check
        _
      $region10: #{tpu_custom_call.1} parent=5 // pred_check_branch
        %529 = sbr.rel (%p526) target = $region12
      $region11: #{tpu_custom_call.1} parent=5 // pred_region
        %s530 = ssub.s32 %s39, 1
        // Predicated region
        $region13: #{tpu_custom_call.1} parent=11 // pred_check
          %p531 = pneg %p152
        $region14: #{tpu_custom_call.1} parent=11 // pred_check_branch
          %533 = sbr.rel (%p531) target = $region16
        $region15: #{tpu_custom_call.1} parent=11 // pred_region
          _
        $region16: #{tpu_custom_call.1} parent=11 // pred_fallthru
          _
        // Predicated region
        $region17: #{tpu_custom_call.1} parent=11 // pred_check
          %p534 = pneg %p173
        $region18: #{tpu_custom_call.1} parent=11 // pred_check_branch
          %536 = sbr.rel (%p534) target = $region20
        $region19: #{tpu_custom_call.1} parent=11 // pred_region
          _
        $region20: #{tpu_custom_call.1} parent=11 // pred_fallthru
          _
        // Predicated region
        $region21: #{tpu_custom_call.1} parent=11 // pred_check
          %p537 = pneg %p194
        $region22: #{tpu_custom_call.1} parent=11 // pred_check_branch
          %539 = sbr.rel (%p537) target = $region24
        $region23: #{tpu_custom_call.1} parent=11 // pred_region
          _
        $region24: #{tpu_custom_call.1} parent=11 // pred_fallthru
          _
        // Predicated region
        $region25: #{tpu_custom_call.1} parent=11 // pred_check
          %p540 = pneg %p215
        $region26: #{tpu_custom_call.1} parent=11 // pred_check_branch
          %542 = sbr.rel (%p540) target = $region28
        $region27: #{tpu_custom_call.1} parent=11 // pred_region
          _
        $region28: #{tpu_custom_call.1} parent=11 // pred_fallthru
          _
        // Predicated region
        $region29: #{tpu_custom_call.1} parent=11 // pred_check
          %p543 = pneg %p236
        $region30: #{tpu_custom_call.1} parent=11 // pred_check_branch
          %545 = sbr.rel (%p543) target = $region32
        $region31: #{tpu_custom_call.1} parent=11 // pred_region
          _
        $region32: #{tpu_custom_call.1} parent=11 // pred_fallthru
          _
        // Predicated region
        $region33: #{tpu_custom_call.1} parent=11 // pred_check
          %p546 = pneg %p257
        $region34: #{tpu_custom_call.1} parent=11 // pred_check_branch
          %548 = sbr.rel (%p546) target = $region36
        $region35: #{tpu_custom_call.1} parent=11 // pred_region
          %s550 = ssub.s32 16, 16
          %551 = vsyncadd [#allocation9], %s550
          %s553 = sshll.u32 [#allocation8], 4
          %s554 = int_to_ptr.vmem [resolvable:$true] %s553
          %556 = dma.hbm_to_vmem [thread:$0]  %s8, 16, %s554, [#allocation9]
        $region36: #{tpu_custom_call.1} parent=11 // pred_fallthru
          _
        // Predicated region
        $region37: #{tpu_custom_call.1} parent=11 // pred_check
          %p557 = pneg %p278
        $region38: #{tpu_custom_call.1} parent=11 // pred_check_branch
          %559 = sbr.rel (%p557) target = $region40
        $region39: #{tpu_custom_call.1} parent=11 // pred_region
          %s561 = ssub.s32 512, 512
          %562 = vsyncadd [#allocation9], %s561
          %s563 = sshll.u32 [#allocation10], 4
          %s564 = int_to_ptr.vmem [resolvable:$true] %s563
          %569 = dma.hbm_to_vmem [thread:$0]  %s9, 512, %s564, [#allocation9], 128, 128, 8
        $region40: #{tpu_custom_call.1} parent=11 // pred_fallthru
          _
        // Predicated region
        $region41: #{tpu_custom_call.1} parent=11 // pred_check
          %p570 = pneg %p299
        $region42: #{tpu_custom_call.1} parent=11 // pred_check_branch
          %572 = sbr.rel (%p570) target = $region44
        $region43: #{tpu_custom_call.1} parent=11 // pred_region
          %s574 = ssub.s32 16, 16
          %575 = vsyncadd [#allocation12], %s574
          %s577 = sshll.u32 [#allocation11], 4
          %s578 = int_to_ptr.vmem [resolvable:$true] %s577
          %580 = dma.hbm_to_vmem [thread:$0]  %s10, 16, %s578, [#allocation12]
        $region44: #{tpu_custom_call.1} parent=11 // pred_fallthru
          _
        // Predicated region
        $region45: #{tpu_custom_call.1} parent=11 // pred_check
          %p581 = pneg %p320
        $region46: #{tpu_custom_call.1} parent=11 // pred_check_branch
          %583 = sbr.rel (%p581) target = $region48
        $region47: #{tpu_custom_call.1} parent=11 // pred_region
          _
        $region48: #{tpu_custom_call.1} parent=11 // pred_fallthru
          _
        // Predicated region
        $region49: #{tpu_custom_call.1} parent=11 // pred_check
          %p584 = pneg %p341
        $region50: #{tpu_custom_call.1} parent=11 // pred_check_branch
          %586 = sbr.rel (%p584) target = $region52
        $region51: #{tpu_custom_call.1} parent=11 // pred_region
          %s588 = ssub.s32 16, 16
          %589 = vsyncadd [#allocation12], %s588
          %s591 = sshll.u32 [#allocation13], 4
          %s592 = int_to_ptr.vmem [resolvable:$true] %s591
          %594 = dma.hbm_to_vmem [thread:$0]  %s12, 16, %s592, [#allocation12]
        $region52: #{tpu_custom_call.1} parent=11 // pred_fallthru
          _
        // Predicated region
        $region53: #{tpu_custom_call.1} parent=11 // pred_check
          %p595 = pneg %p362
        $region54: #{tpu_custom_call.1} parent=11 // pred_check_branch
          %597 = sbr.rel (%p595) target = $region56
        $region55: #{tpu_custom_call.1} parent=11 // pred_region
          %s599 = ssub.s32 16, 16
          %600 = vsyncadd [#allocation15], %s599
          %s602 = sshll.u32 [#allocation14], 4
          %s603 = int_to_ptr.vmem [resolvable:$true] %s602
          %605 = dma.hbm_to_vmem [thread:$0]  %s13, 16, %s603, [#allocation15]
        $region56: #{tpu_custom_call.1} parent=11 // pred_fallthru
          _
        // Predicated region
        $region57: #{tpu_custom_call.1} parent=11 // pred_check
          %p606 = pneg %p383
        $region58: #{tpu_custom_call.1} parent=11 // pred_check_branch
          %608 = sbr.rel (%p606) target = $region60
        $region59: #{tpu_custom_call.1} parent=11 // pred_region
          %s610 = ssub.s32 512, 512
          %611 = vsyncadd [#allocation15], %s610
          %s612 = sshll.u32 [#allocation16], 4
          %s613 = int_to_ptr.vmem [resolvable:$true] %s612
          %618 = dma.hbm_to_vmem [thread:$0]  %s14, 512, %s613, [#allocation15], 128, 128, 8
        $region60: #{tpu_custom_call.1} parent=11 // pred_fallthru
          _
        // Predicated region
        $region61: #{tpu_custom_call.1} parent=11 // pred_check
          %p619 = pneg %p404
        $region62: #{tpu_custom_call.1} parent=11 // pred_check_branch
          %621 = sbr.rel (%p619) target = $region64
        $region63: #{tpu_custom_call.1} parent=11 // pred_region
          %s623 = ssub.s32 16, 16
          %624 = vsyncadd [#allocation18], %s623
          %s626 = sshll.u32 [#allocation17], 4
          %s627 = int_to_ptr.vmem [resolvable:$true] %s626
          %629 = dma.hbm_to_vmem [thread:$0]  %s15, 16, %s627, [#allocation18]
        $region64: #{tpu_custom_call.1} parent=11 // pred_fallthru
          _
        // Predicated region
        $region65: #{tpu_custom_call.1} parent=11 // pred_check
          %p630 = pneg %p425
        $region66: #{tpu_custom_call.1} parent=11 // pred_check_branch
          %632 = sbr.rel (%p630) target = $region68
        $region67: #{tpu_custom_call.1} parent=11 // pred_region
          _
        $region68: #{tpu_custom_call.1} parent=11 // pred_fallthru
          _
        // Predicated region
        $region69: #{tpu_custom_call.1} parent=11 // pred_check
          %p633 = pneg %p446
        $region70: #{tpu_custom_call.1} parent=11 // pred_check_branch
          %635 = sbr.rel (%p633) target = $region72
        $region71: #{tpu_custom_call.1} parent=11 // pred_region
          _
        $region72: #{tpu_custom_call.1} parent=11 // pred_fallthru
          _
        // Predicated region
        $region73: #{tpu_custom_call.1} parent=11 // pred_check
          %p636 = pneg %p467
        $region74: #{tpu_custom_call.1} parent=11 // pred_check_branch
          %638 = sbr.rel (%p636) target = $region76
        $region75: #{tpu_custom_call.1} parent=11 // pred_region
          _
        $region76: #{tpu_custom_call.1} parent=11 // pred_fallthru
          _
        // Predicated region
        $region77: #{tpu_custom_call.1} parent=11 // pred_check
          %p639 = pneg %p488
        $region78: #{tpu_custom_call.1} parent=11 // pred_check_branch
          %641 = sbr.rel (%p639) target = $region80
        $region79: #{tpu_custom_call.1} parent=11 // pred_region
          _
        $region80: #{tpu_custom_call.1} parent=11 // pred_fallthru
          _
      $region12: #{tpu_custom_call.1} parent=5 // pred_fallthru
        _
      %p642 = scmp.lt.s32.totalorder %s39, 2
      // Predicated region
      $region81: #{tpu_custom_call.1} parent=5 // pred_check
        %p643 = pneg %p642
      $region82: #{tpu_custom_call.1} parent=5 // pred_check_branch
        %645 = sbr.rel (%p643) target = $region84
      $region83: #{tpu_custom_call.1} parent=5 // pred_region
        // Predicated region
        $region85: #{tpu_custom_call.1} parent=83 // pred_check
          %p646 = pneg %p73
        $region86: #{tpu_custom_call.1} parent=83 // pred_check_branch
          %648 = sbr.rel (%p646) target = $region88
        $region87: #{tpu_custom_call.1} parent=83 // pred_region
          %s649 = sand.u32 %s63, 1
          %s650 = scalar_lea.sflag [#allocation3], %s649
          %s651 = sand.u32 %s63, 1
          %s652 = smul.addr %s651, 8
          %s653 = scalar_lea.vmem [#allocation2], %s652
          %s655 = ssub.s32 128, 128
          %656 = vsyncadd %s650, %s655
          %s657 = sadd.s32 %s47, %s46
          %s658 = smul.addr %s657, 128
          %s659 = scalar_lea.hbm %s0, %s658
          %s661 = sshll.u32 %s653, 4
          %s662 = int_to_ptr.vmem [resolvable:$true] %s661
          %664 = dma.hbm_to_vmem [thread:$0]  %s659, 128, %s662, %s650
        $region88: #{tpu_custom_call.1} parent=83 // pred_fallthru
          _
        // Predicated region
        $region89: #{tpu_custom_call.1} parent=83 // pred_check
          %p665 = pneg %p99
        $region90: #{tpu_custom_call.1} parent=83 // pred_check_branch
          %667 = sbr.rel (%p665) target = $region92
        $region91: #{tpu_custom_call.1} parent=83 // pred_region
          %s668 = sand.u32 %s39, 1
          %s669 = scalar_lea.sflag [#allocation6], %s668
          %s670 = sand.u32 %s89, 1
          %s671 = smul.addr %s670, 8
          %s672 = scalar_lea.vmem [#allocation5], %s671
          %s674 = ssub.s32 128, 128
          %675 = vsyncadd %s669, %s674
          %s676 = smul.addr %s46, 128
          %s677 = scalar_lea.hbm %s1, %s676
          %s679 = sshll.u32 %s672, 4
          %s680 = int_to_ptr.vmem [resolvable:$true] %s679
          %682 = dma.hbm_to_vmem [thread:$0]  %s677, 128, %s680, %s669
        $region92: #{tpu_custom_call.1} parent=83 // pred_fallthru
          _
        // Predicated region
        $region93: #{tpu_custom_call.1} parent=83 // pred_check
          %p683 = pneg %p125
        $region94: #{tpu_custom_call.1} parent=83 // pred_check_branch
          %685 = sbr.rel (%p683) target = $region96
        $region95: #{tpu_custom_call.1} parent=83 // pred_region
          %s686 = sand.u32 %s39, 1
          %s687 = scalar_lea.sflag [#allocation6], %s686
          %s688 = sand.u32 %s115, 1
          %s689 = smul.addr %s688, 8
          %s690 = scalar_lea.vmem [#allocation7], %s689
          %s692 = ssub.s32 128, 128
          %693 = vsyncadd %s687, %s692
          %s694 = smul.addr %s46, 128
          %s695 = scalar_lea.hbm %s2, %s694
          %s697 = sshll.u32 %s690, 4
          %s698 = int_to_ptr.vmem [resolvable:$true] %s697
          %700 = dma.hbm_to_vmem [thread:$0]  %s695, 128, %s698, %s687
        $region96: #{tpu_custom_call.1} parent=83 // pred_fallthru
          _
      $region84: #{tpu_custom_call.1} parent=5 // pred_fallthru
        _
      %p701 = scmp.le.s32.totalorder 1, %s39
      %p702 = scmp.lt.s32.totalorder %s39, 3
      %p703 = pnand %p701, %p702
      %p704 = pneg %p703
      // Predicated region
      $region97: #{tpu_custom_call.1} parent=5 // pred_check
        _
      $region98: #{tpu_custom_call.1} parent=5 // pred_check_branch
        %706 = sbr.rel (%p703) target = $region100
      $region99: #{tpu_custom_call.1} parent=5 // pred_region
        %s707 = ssub.s32 %s39, 1
        %s708 = sand.u32 %s66, 1
        %s709 = scalar_lea.sflag [#allocation3], %s708
        %s710 = sand.u32 %s66, 1
        %s711 = smul.addr %s710, 8
        %s712 = scalar_lea.vmem [#allocation2], %s711
        // Predicated region
        $region101: #{tpu_custom_call.1} parent=99 // pred_check
          %p713 = pneg %p79
        $region102: #{tpu_custom_call.1} parent=99 // pred_check_branch
          %715 = sbr.rel (%p713) target = $region104
        $region103: #{tpu_custom_call.1} parent=99 // pred_region
          %716 = dma.done %s709, 128
        $region104: #{tpu_custom_call.1} parent=99 // pred_fallthru
          _
        %s717 = sand.u32 %s44, 1
        %s718 = scalar_lea.sflag [#allocation6], %s717
        %s719 = sand.u32 %s92, 1
        %s720 = smul.addr %s719, 8
        %s721 = scalar_lea.vmem [#allocation5], %s720
        // Predicated region
        $region105: #{tpu_custom_call.1} parent=99 // pred_check
          %p722 = pneg %p105
        $region106: #{tpu_custom_call.1} parent=99 // pred_check_branch
          %724 = sbr.rel (%p722) target = $region108
        $region107: #{tpu_custom_call.1} parent=99 // pred_region
          %725 = dma.done %s718, 128
        $region108: #{tpu_custom_call.1} parent=99 // pred_fallthru
          _
        %s726 = sand.u32 %s44, 1
        %s727 = scalar_lea.sflag [#allocation6], %s726
        %s728 = sand.u32 %s118, 1
        %s729 = smul.addr %s728, 8
        %s730 = scalar_lea.vmem [#allocation7], %s729
        // Predicated region
        $region109: #{tpu_custom_call.1} parent=99 // pred_check
          %p731 = pneg %p131
        $region110: #{tpu_custom_call.1} parent=99 // pred_check_branch
          %733 = sbr.rel (%p731) target = $region112
        $region111: #{tpu_custom_call.1} parent=99 // pred_region
          %734 = dma.done %s727, 128
        $region112: #{tpu_custom_call.1} parent=99 // pred_fallthru
          _
        // Predicated region
        $region113: #{tpu_custom_call.1} parent=99 // pred_check
          %p735 = pneg %p257
        $region114: #{tpu_custom_call.1} parent=99 // pred_check_branch
          %737 = sbr.rel (%p735) target = $region116
        $region115: #{tpu_custom_call.1} parent=99 // pred_region
          %738 = dma.done [#allocation9], 16
        $region116: #{tpu_custom_call.1} parent=99 // pred_fallthru
          _
        // Predicated region
        $region117: #{tpu_custom_call.1} parent=99 // pred_check
          %p739 = pneg %p278
        $region118: #{tpu_custom_call.1} parent=99 // pred_check_branch
          %741 = sbr.rel (%p739) target = $region120
        $region119: #{tpu_custom_call.1} parent=99 // pred_region
          %742 = dma.done [#allocation9], 512
        $region120: #{tpu_custom_call.1} parent=99 // pred_fallthru
          _
        // Predicated region
        $region121: #{tpu_custom_call.1} parent=99 // pred_check
          %p743 = pneg %p299
        $region122: #{tpu_custom_call.1} parent=99 // pred_check_branch
          %745 = sbr.rel (%p743) target = $region124
        $region123: #{tpu_custom_call.1} parent=99 // pred_region
          %746 = dma.done [#allocation12], 16
        $region124: #{tpu_custom_call.1} parent=99 // pred_fallthru
          _
        // Predicated region
        $region125: #{tpu_custom_call.1} parent=99 // pred_check
          %p747 = pneg %p341
        $region126: #{tpu_custom_call.1} parent=99 // pred_check_branch
          %749 = sbr.rel (%p747) target = $region128
        $region127: #{tpu_custom_call.1} parent=99 // pred_region
          %750 = dma.done [#allocation12], 16
        $region128: #{tpu_custom_call.1} parent=99 // pred_fallthru
          _
        // Predicated region
        $region129: #{tpu_custom_call.1} parent=99 // pred_check
          %p751 = pneg %p362
        $region130: #{tpu_custom_call.1} parent=99 // pred_check_branch
          %753 = sbr.rel (%p751) target = $region132
        $region131: #{tpu_custom_call.1} parent=99 // pred_region
          %754 = dma.done [#allocation15], 16
        $region132: #{tpu_custom_call.1} parent=99 // pred_fallthru
          _
        // Predicated region
        $region133: #{tpu_custom_call.1} parent=99 // pred_check
          %p755 = pneg %p383
        $region134: #{tpu_custom_call.1} parent=99 // pred_check_branch
          %757 = sbr.rel (%p755) target = $region136
        $region135: #{tpu_custom_call.1} parent=99 // pred_region
          %758 = dma.done [#allocation15], 512
        $region136: #{tpu_custom_call.1} parent=99 // pred_fallthru
          _
        // Predicated region
        $region137: #{tpu_custom_call.1} parent=99 // pred_check
          %p759 = pneg %p404
        $region138: #{tpu_custom_call.1} parent=99 // pred_check_branch
          %761 = sbr.rel (%p759) target = $region140
        $region139: #{tpu_custom_call.1} parent=99 // pred_region
          %762 = dma.done [#allocation18], 16
        $region140: #{tpu_custom_call.1} parent=99 // pred_fallthru
          _
        %s763 = sand.u32 %s66, 1
        %s764 = scalar_lea.sflag [#allocation3], %s763
        %s765 = sand.u32 %s66, 1
        %s766 = smul.addr %s765, 8
        %s767 = scalar_lea.vmem [#allocation2], %s766
        %p768 = pneg %p79
        %p769 = pneg %p76
        %s770 = sand.u32 %s44, 1
        %s771 = scalar_lea.sflag [#allocation6], %s770
        %s772 = sand.u32 %s92, 1
        %s773 = smul.addr %s772, 8
        %s774 = scalar_lea.vmem [#allocation5], %s773
        %p775 = pneg %p105
        %p776 = pneg %p102
        %s777 = sand.u32 %s44, 1
        %s778 = scalar_lea.sflag [#allocation6], %s777
        %s779 = sand.u32 %s118, 1
        %s780 = smul.addr %s779, 8
        %s781 = scalar_lea.vmem [#allocation7], %s780
        %p782 = pneg %p131
        %p783 = pneg %p128
        %p784 = pneg %p152
        %p785 = pneg %p149
        %p786 = pneg %p173
        %p787 = pneg %p170
        %p788 = pneg %p194
        %p789 = pneg %p191
        %p790 = pneg %p215
        %p791 = pneg %p212
        %p792 = pneg %p236
        %p793 = pneg %p233
        %p794 = pneg %p257
        %p795 = pneg %p254
        %p796 = pneg %p278
        %p797 = pneg %p275
        %p798 = pneg %p299
        %p799 = pneg %p296
        %p800 = pneg %p320
        %p801 = pneg %p317
        %p802 = pneg %p341
        %p803 = pneg %p338
        %p804 = pneg %p362
        %p805 = pneg %p359
        %p806 = pneg %p383
        %p807 = pneg %p380
        %p808 = pneg %p404
        %p809 = pneg %p401
        %p810 = pneg %p425
        %p811 = pneg %p422
        %p812 = pneg %p446
        %p813 = pneg %p443
        %p814 = pneg %p467
        %p815 = pneg %p464
        %p816 = pneg %p488
        %p817 = pneg %p485
        %p818 = pneg %p516
        %p819 = pneg %p513
        %s820 = sand.u32 %s503, 1
        %s821 = scalar_lea.sflag [#allocation4], %s820
        %s822 = sand.u32 %s503, 1
        %s823 = smul.addr %s822, 8
        %s824 = scalar_lea.vmem [#allocation19], %s823
        %s825 = smul.u32 %s49, 8
        %v826 = vld [vmem:[%s712] sm:$0xff]
        %v827 = vld [vmem:[%s721] sm:$0xff]
        %v828 = vld [vmem:[%s730] sm:$0xff]
        %v829 = vld [vmem:[%s3] sm:$0xff]
        %v830 = vld [vmem:[%s3 + $0x8] sm:$0xff]
        %v831 = vld [vmem:[%s3 + $0x10] sm:$0xff]
        %v832 = vld [vmem:[%s3 + $0x18] sm:$0xff]
        %v833 = vld [vmem:[%s4] sm:$0x1]
        %v835 = vlaneseq
        %v836 = vshrl.u32 %v835, 7
        %v837 = vsub.s32 0, %v836
        %v838 = vrot.slane %v833, %v837
        %vm840 = vcmask 261120
        %v842 = vsel %vm840, %v826, 0
        %844 = vmatprep.subr.mxu0 0.0
        %845 = vmatpush1.msra.mxu0 0.0
        %846 = vmatprep.subr.mxu0 0.0
        %847 = vmatpush1.msra.mxu0 0.0
        %848 = vmatprep.subr.mxu0 0.0
        %849 = vmatpush1.msra.mxu0 0.0
        %850 = vmatprep.subr.mxu0 0.0
        %851 = vmatpush1.msra.mxu0 0.0
        %852 = vmatprep.subr.mxu0 0.0
        %853 = vmatpush1.msra.mxu0 0.0
        %854 = vmatprep.subr.mxu0 0.0
        %855 = vmatpush1.msra.mxu0 0.0
        %856 = vmatprep.subr.mxu0 0.0
        %857 = vmatpush1.msra.mxu0 0.0
        %858 = vmatprep.subr.mxu0 0.0
        %859 = vmatpush1.msra.mxu0 0.0
        %860 = vmatprep.subr.mxu0 0.0
        %861 = vmatpush1.msra.mxu0 0.0
        %862 = vmatprep.subr.mxu0 0.0
        %863 = vmatpush1.msra.mxu0 0.0
        %864 = vmatprep.subr.mxu0 0.0
        %865 = vmatpush1.msra.mxu0 0.0
        %866 = vmatprep.subr.mxu0 0.0
        %867 = vmatpush1.msra.mxu0 0.0
        %868 = vmatprep.subr.mxu0 0.0
        %869 = vmatpush1.msra.mxu0 %v832
        %870 = vmatprep.subr.mxu0 0.0
        %871 = vmatpush1.msra.mxu0 %v831
        %872 = vmatprep.subr.mxu0 0.0
        %873 = vmatpush1.msra.mxu0 %v830
        %874 = vmatprep.subr.mxu0 0.0
        %875 = vmatpush1.msra.mxu0 %v829
        %876 = vmatprep.subr.mxu0 0.0
        %877 = vmatpush2.msra.mxu0 0.0
        %878 = vmatprep.subr.mxu0 0.0
        %879 = vmatpush2.msra.mxu0 0.0
        %880 = vmatprep.subr.mxu0 0.0
        %881 = vmatpush2.msra.mxu0 0.0
        %882 = vmatprep.subr.mxu0 0.0
        %883 = vmatpush2.msra.mxu0 0.0
        %884 = vmatprep.subr.mxu0 0.0
        %885 = vmatpush2.msra.mxu0 0.0
        %886 = vmatprep.subr.mxu0 0.0
        %887 = vmatpush2.msra.mxu0 0.0
        %888 = vmatprep.subr.mxu0 0.0
        %889 = vmatpush2.msra.mxu0 0.0
        %890 = vmatprep.subr.mxu0 0.0
        %891 = vmatpush2.msra.mxu0 0.0
        %892 = vmatprep.subr.mxu0 0.0
        %893 = vmatpush2.msra.mxu0 0.0
        %894 = vmatprep.subr.mxu0 0.0
        %895 = vmatpush2.msra.mxu0 0.0
        %896 = vmatprep.subr.mxu0 0.0
        %897 = vmatpush2.msra.mxu0 0.0
        %898 = vmatprep.subr.mxu0 0.0
        %899 = vmatpush2.msra.mxu0 0.0
        %900 = vmatprep.subr.mxu0 0.0
        %901 = vmatpush2.msra.mxu0 0.0
        %902 = vmatprep.subr.mxu0 0.0
        %903 = vmatpush2.msra.mxu0 0.0
        %904 = vmatprep.subr.mxu0 0.0
        %905 = vmatpush2.msra.mxu0 0.0
        %906 = vmatprep.subr.mxu0 0.0
        %907 = vmatpush2.msra.mxu0 0.0
        %908 = vmatprep.mubr.f32.mxu0 0.0
        %909 = vmatmul.mubr.f32.gmra.mxu0 %v842
        %v910 = vpop.f32.mrf.mxu0
        %v911 = vadd.f32 %v838, %v910
        %v912 = vpop.f32.mrf.mxu0
        %913 = vdwg.mxu0
        %v914 = vld [vmem:[%s5] sm:$0xff]
        %v915 = vld [vmem:[%s5 + $0x8] sm:$0xff]
        %v916 = vld [vmem:[%s5 + $0x10] sm:$0xff]
        %v917 = vld [vmem:[%s5 + $0x18] sm:$0xff]
        %v918 = vld [vmem:[%s6] sm:$0x1]
        %v920 = vlaneseq
        %v921 = vshrl.u32 %v920, 7
        %v922 = vsub.s32 0, %v921
        %v923 = vrot.slane %v918, %v922
        %v926 = vsel %vm840, %v827, 0
        %928 = vmatprep.subr.mxu0 0.0
        %929 = vmatpush1.msra.mxu0 0.0
        %930 = vmatprep.subr.mxu0 0.0
        %931 = vmatpush1.msra.mxu0 0.0
        %932 = vmatprep.subr.mxu0 0.0
        %933 = vmatpush1.msra.mxu0 0.0
        %934 = vmatprep.subr.mxu0 0.0
        %935 = vmatpush1.msra.mxu0 0.0
        %936 = vmatprep.subr.mxu0 0.0
        %937 = vmatpush1.msra.mxu0 0.0
        %938 = vmatprep.subr.mxu0 0.0
        %939 = vmatpush1.msra.mxu0 0.0
        %940 = vmatprep.subr.mxu0 0.0
        %941 = vmatpush1.msra.mxu0 0.0
        %942 = vmatprep.subr.mxu0 0.0
        %943 = vmatpush1.msra.mxu0 0.0
        %944 = vmatprep.subr.mxu0 0.0
        %945 = vmatpush1.msra.mxu0 0.0
        %946 = vmatprep.subr.mxu0 0.0
        %947 = vmatpush1.msra.mxu0 0.0
        %948 = vmatprep.subr.mxu0 0.0
        %949 = vmatpush1.msra.mxu0 0.0
        %950 = vmatprep.subr.mxu0 0.0
        %951 = vmatpush1.msra.mxu0 0.0
        %952 = vmatprep.subr.mxu0 0.0
        %953 = vmatpush1.msra.mxu0 %v917
        %954 = vmatprep.subr.mxu0 0.0
        %955 = vmatpush1.msra.mxu0 %v916
        %956 = vmatprep.subr.mxu0 0.0
        %957 = vmatpush1.msra.mxu0 %v915
        %958 = vmatprep.subr.mxu0 0.0
        %959 = vmatpush1.msra.mxu0 %v914
        %960 = vmatprep.subr.mxu0 0.0
        %961 = vmatpush2.msra.mxu0 0.0
        %962 = vmatprep.subr.mxu0 0.0
        %963 = vmatpush2.msra.mxu0 0.0
        %964 = vmatprep.subr.mxu0 0.0
        %965 = vmatpush2.msra.mxu0 0.0
        %966 = vmatprep.subr.mxu0 0.0
        %967 = vmatpush2.msra.mxu0 0.0
        %968 = vmatprep.subr.mxu0 0.0
        %969 = vmatpush2.msra.mxu0 0.0
        %970 = vmatprep.subr.mxu0 0.0
        %971 = vmatpush2.msra.mxu0 0.0
        %972 = vmatprep.subr.mxu0 0.0
        %973 = vmatpush2.msra.mxu0 0.0
        %974 = vmatprep.subr.mxu0 0.0
        %975 = vmatpush2.msra.mxu0 0.0
        %976 = vmatprep.subr.mxu0 0.0
        %977 = vmatpush2.msra.mxu0 0.0
        %978 = vmatprep.subr.mxu0 0.0
        %979 = vmatpush2.msra.mxu0 0.0
        %980 = vmatprep.subr.mxu0 0.0
        %981 = vmatpush2.msra.mxu0 0.0
        %982 = vmatprep.subr.mxu0 0.0
        %983 = vmatpush2.msra.mxu0 0.0
        %984 = vmatprep.subr.mxu0 0.0
        %985 = vmatpush2.msra.mxu0 0.0
        %986 = vmatprep.subr.mxu0 0.0
        %987 = vmatpush2.msra.mxu0 0.0
        %988 = vmatprep.subr.mxu0 0.0
        %989 = vmatpush2.msra.mxu0 0.0
        %990 = vmatprep.subr.mxu0 0.0
        %991 = vmatpush2.msra.mxu0 0.0
        %992 = vmatprep.mubr.f32.mxu0 0.0
        %993 = vmatmul.mubr.f32.gmra.mxu0 %v926
        %v994 = vpop.f32.mrf.mxu0
        %v995 = vadd.f32 %v923, %v994
        %v996 = vpop.f32.mrf.mxu0
        %997 = vdwg.mxu0
        %v998 = vld [vmem:[%s7] sm:$0xff]
        %v999 = vld [vmem:[%s7 + $0x8] sm:$0xff]
        %v1000 = vld [vmem:[%s7 + $0x10] sm:$0xff]
        %v1001 = vld [vmem:[%s7 + $0x18] sm:$0xff]
        %v1002 = vld [vmem:[#allocation8] sm:$0x1]
        %v1004 = vlaneseq
        %v1005 = vshrl.u32 %v1004, 7
        %v1006 = vsub.s32 0, %v1005
        %v1007 = vrot.slane %v1002, %v1006
        %v1010 = vsel %vm840, %v828, 0
        %1012 = vmatprep.subr.mxu0 0.0
        %1013 = vmatpush1.msra.mxu0 0.0
        %1014 = vmatprep.subr.mxu0 0.0
        %1015 = vmatpush1.msra.mxu0 0.0
        %1016 = vmatprep.subr.mxu0 0.0
        %1017 = vmatpush1.msra.mxu0 0.0
        %1018 = vmatprep.subr.mxu0 0.0
        %1019 = vmatpush1.msra.mxu0 0.0
        %1020 = vmatprep.subr.mxu0 0.0
        %1021 = vmatpush1.msra.mxu0 0.0
        %1022 = vmatprep.subr.mxu0 0.0
        %1023 = vmatpush1.msra.mxu0 0.0
        %1024 = vmatprep.subr.mxu0 0.0
        %1025 = vmatpush1.msra.mxu0 0.0
        %1026 = vmatprep.subr.mxu0 0.0
        %1027 = vmatpush1.msra.mxu0 0.0
        %1028 = vmatprep.subr.mxu0 0.0
        %1029 = vmatpush1.msra.mxu0 0.0
        %1030 = vmatprep.subr.mxu0 0.0
        %1031 = vmatpush1.msra.mxu0 0.0
        %1032 = vmatprep.subr.mxu0 0.0
        %1033 = vmatpush1.msra.mxu0 0.0
        %1034 = vmatprep.subr.mxu0 0.0
        %1035 = vmatpush1.msra.mxu0 0.0
        %1036 = vmatprep.subr.mxu0 0.0
        %1037 = vmatpush1.msra.mxu0 %v1001
        %1038 = vmatprep.subr.mxu0 0.0
        %1039 = vmatpush1.msra.mxu0 %v1000
        %1040 = vmatprep.subr.mxu0 0.0
        %1041 = vmatpush1.msra.mxu0 %v999
        %1042 = vmatprep.subr.mxu0 0.0
        %1043 = vmatpush1.msra.mxu0 %v998
        %1044 = vmatprep.subr.mxu0 0.0
        %1045 = vmatpush2.msra.mxu0 0.0
        %1046 = vmatprep.subr.mxu0 0.0
        %1047 = vmatpush2.msra.mxu0 0.0
        %1048 = vmatprep.subr.mxu0 0.0
        %1049 = vmatpush2.msra.mxu0 0.0
        %1050 = vmatprep.subr.mxu0 0.0
        %1051 = vmatpush2.msra.mxu0 0.0
        %1052 = vmatprep.subr.mxu0 0.0
        %1053 = vmatpush2.msra.mxu0 0.0
        %1054 = vmatprep.subr.mxu0 0.0
        %1055 = vmatpush2.msra.mxu0 0.0
        %1056 = vmatprep.subr.mxu0 0.0
        %1057 = vmatpush2.msra.mxu0 0.0
        %1058 = vmatprep.subr.mxu0 0.0
        %1059 = vmatpush2.msra.mxu0 0.0
        %1060 = vmatprep.subr.mxu0 0.0
        %1061 = vmatpush2.msra.mxu0 0.0
        %1062 = vmatprep.subr.mxu0 0.0
        %1063 = vmatpush2.msra.mxu0 0.0
        %1064 = vmatprep.subr.mxu0 0.0
        %1065 = vmatpush2.msra.mxu0 0.0
        %1066 = vmatprep.subr.mxu0 0.0
        %1067 = vmatpush2.msra.mxu0 0.0
        %1068 = vmatprep.subr.mxu0 0.0
        %1069 = vmatpush2.msra.mxu0 0.0
        %1070 = vmatprep.subr.mxu0 0.0
        %1071 = vmatpush2.msra.mxu0 0.0
        %1072 = vmatprep.subr.mxu0 0.0
        %1073 = vmatpush2.msra.mxu0 0.0
        %1074 = vmatprep.subr.mxu0 0.0
        %1075 = vmatpush2.msra.mxu0 0.0
        %1076 = vmatprep.mubr.f32.mxu0 0.0
        %1077 = vmatmul.mubr.f32.gmra.mxu0 %v1010
        %v1078 = vpop.f32.mrf.mxu0
        %v1079 = vadd.f32 %v1007, %v1078
        %v1080 = vpop.f32.mrf.mxu0
        %1081 = vdwg.mxu0
        %v1082 = vmul.f32 %v911, 0.35355338
        %1084 = vrot.lane.b32.xlu0 %v1082, 120
        %v1085 = vpop.permute.xlu0 %1084
        %1086 = vrot.lane.b32.xlu0 %v1082, 112
        %v1087 = vpop.permute.xlu0 %1086
        %1088 = vrot.lane.b32.xlu0 %v1082, 104
        %v1089 = vpop.permute.xlu0 %1088
        %1091 = vrot.lane.b32.xlu0 %v995, 120
        %v1092 = vpop.permute.xlu0 %1091
        %1093 = vrot.lane.b32.xlu0 %v995, 112
        %v1094 = vpop.permute.xlu0 %1093
        %1095 = vrot.lane.b32.xlu0 %v995, 104
        %v1096 = vpop.permute.xlu0 %1095
        %1098 = vrot.lane.b32.xlu0 %v1079, 120
        %v1099 = vpop.permute.xlu0 %1098
        %1101 = vrot.lane.b32.xlu0 %v1079, 112
        %v1102 = vpop.permute.xlu0 %1101
        %1104 = vrot.lane.b32.xlu0 %v1079, 104
        %v1105 = vpop.permute.xlu0 %1104
        %vm1107 = vcmask 64512
        %v1108 = vsel %vm1107, %v1082, 0
        %v1110 = vsel %vm1107, %v995, 0
        %1112 = vmatprep.subr.mxu0 0.0
        %1113 = vmatpush1.xpose.msra.mxu0 0.0
        %1114 = vmatprep.subr.mxu0 0.0
        %1115 = vmatpush1.xpose.msra.mxu0 0.0
        %1116 = vmatprep.subr.mxu0 0.0
        %1117 = vmatpush1.xpose.msra.mxu0 0.0
        %1118 = vmatprep.subr.mxu0 0.0
        %1119 = vmatpush1.xpose.msra.mxu0 0.0
        %1120 = vmatprep.subr.mxu0 0.0
        %1121 = vmatpush1.xpose.msra.mxu0 0.0
        %1122 = vmatprep.subr.mxu0 0.0
        %1123 = vmatpush1.xpose.msra.mxu0 0.0
        %1124 = vmatprep.subr.mxu0 0.0
        %1125 = vmatpush1.xpose.msra.mxu0 0.0
        %1126 = vmatprep.subr.mxu0 0.0
        %1127 = vmatpush1.xpose.msra.mxu0 0.0
        %1128 = vmatprep.subr.mxu0 0.0
        %1129 = vmatpush1.xpose.msra.mxu0 0.0
        %1130 = vmatprep.subr.mxu0 0.0
        %1131 = vmatpush1.xpose.msra.mxu0 0.0
        %1132 = vmatprep.subr.mxu0 0.0
        %1133 = vmatpush1.xpose.msra.mxu0 0.0
        %1134 = vmatprep.subr.mxu0 0.0
        %1135 = vmatpush1.xpose.msra.mxu0 0.0
        %1136 = vmatprep.subr.mxu0 0.0
        %1137 = vmatpush1.xpose.msra.mxu0 0.0
        %1138 = vmatprep.subr.mxu0 0.0
        %1139 = vmatpush1.xpose.msra.mxu0 0.0
        %1140 = vmatprep.subr.mxu0 0.0
        %1141 = vmatpush1.xpose.msra.mxu0 0.0
        %1142 = vmatprep.subr.mxu0 0.0
        %1143 = vmatpush1.xpose.msra.mxu0 %v1110
        %1144 = vmatprep.subr.mxu0 0.0
        %1145 = vmatpush2.xpose.msra.mxu0 0.0
        %1146 = vmatprep.subr.mxu0 0.0
        %1147 = vmatpush2.xpose.msra.mxu0 0.0
        %1148 = vmatprep.subr.mxu0 0.0
        %1149 = vmatpush2.xpose.msra.mxu0 0.0
        %1150 = vmatprep.subr.mxu0 0.0
        %1151 = vmatpush2.xpose.msra.mxu0 0.0
        %1152 = vmatprep.subr.mxu0 0.0
        %1153 = vmatpush2.xpose.msra.mxu0 0.0
        %1154 = vmatprep.subr.mxu0 0.0
        %1155 = vmatpush2.xpose.msra.mxu0 0.0
        %1156 = vmatprep.subr.mxu0 0.0
        %1157 = vmatpush2.xpose.msra.mxu0 0.0
        %1158 = vmatprep.subr.mxu0 0.0
        %1159 = vmatpush2.xpose.msra.mxu0 0.0
        %1160 = vmatprep.subr.mxu0 0.0
        %1161 = vmatpush2.xpose.msra.mxu0 0.0
        %1162 = vmatprep.subr.mxu0 0.0
        %1163 = vmatpush2.xpose.msra.mxu0 0.0
        %1164 = vmatprep.subr.mxu0 0.0
        %1165 = vmatpush2.xpose.msra.mxu0 0.0
        %1166 = vmatprep.subr.mxu0 0.0
        %1167 = vmatpush2.xpose.msra.mxu0 0.0
        %1168 = vmatprep.subr.mxu0 0.0
        %1169 = vmatpush2.xpose.msra.mxu0 0.0
        %1170 = vmatprep.subr.mxu0 0.0
        %1171 = vmatpush2.xpose.msra.mxu0 0.0
        %1172 = vmatprep.subr.mxu0 0.0
        %1173 = vmatpush2.xpose.msra.mxu0 0.0
        %1174 = vmatprep.subr.mxu0 0.0
        %1175 = vmatpush2.xpose.msra.mxu0 0.0
        %1176 = vmatprep.mubr.f32.mxu0 0.0
        %1177 = vmatmul.mubr.f32.gmra.mxu0 %v1108
        %v1178 = vpop.f32.mrf.mxu0
        %v1179 = vadd.f32 0.0, %v1178
        %v1180 = vpop.f32.mrf.mxu0
        %1181 = vdwg.mxu0
        %v1182 = vsel %vm1107, %v1085, 0
        %v1184 = vsel %vm1107, %v1092, 0
        %1186 = vmatprep.subr.mxu0 0.0
        %1187 = vmatpush1.xpose.msra.mxu0 0.0
        %1188 = vmatprep.subr.mxu0 0.0
        %1189 = vmatpush1.xpose.msra.mxu0 0.0
        %1190 = vmatprep.subr.mxu0 0.0
        %1191 = vmatpush1.xpose.msra.mxu0 0.0
        %1192 = vmatprep.subr.mxu0 0.0
        %1193 = vmatpush1.xpose.msra.mxu0 0.0
        %1194 = vmatprep.subr.mxu0 0.0
        %1195 = vmatpush1.xpose.msra.mxu0 0.0
        %1196 = vmatprep.subr.mxu0 0.0
        %1197 = vmatpush1.xpose.msra.mxu0 0.0
        %1198 = vmatprep.subr.mxu0 0.0
        %1199 = vmatpush1.xpose.msra.mxu0 0.0
        %1200 = vmatprep.subr.mxu0 0.0
        %1201 = vmatpush1.xpose.msra.mxu0 0.0
        %1202 = vmatprep.subr.mxu0 0.0
        %1203 = vmatpush1.xpose.msra.mxu0 0.0
        %1204 = vmatprep.subr.mxu0 0.0
        %1205 = vmatpush1.xpose.msra.mxu0 0.0
        %1206 = vmatprep.subr.mxu0 0.0
        %1207 = vmatpush1.xpose.msra.mxu0 0.0
        %1208 = vmatprep.subr.mxu0 0.0
        %1209 = vmatpush1.xpose.msra.mxu0 0.0
        %1210 = vmatprep.subr.mxu0 0.0
        %1211 = vmatpush1.xpose.msra.mxu0 0.0
        %1212 = vmatprep.subr.mxu0 0.0
        %1213 = vmatpush1.xpose.msra.mxu0 0.0
        %1214 = vmatprep.subr.mxu0 0.0
        %1215 = vmatpush1.xpose.msra.mxu0 0.0
        %1216 = vmatprep.subr.mxu0 0.0
        %1217 = vmatpush1.xpose.msra.mxu0 %v1184
        %1218 = vmatprep.subr.mxu0 0.0
        %1219 = vmatpush2.xpose.msra.mxu0 0.0
        %1220 = vmatprep.subr.mxu0 0.0
        %1221 = vmatpush2.xpose.msra.mxu0 0.0
        %1222 = vmatprep.subr.mxu0 0.0
        %1223 = vmatpush2.xpose.msra.mxu0 0.0
        %1224 = vmatprep.subr.mxu0 0.0
        %1225 = vmatpush2.xpose.msra.mxu0 0.0
        %1226 = vmatprep.subr.mxu0 0.0
        %1227 = vmatpush2.xpose.msra.mxu0 0.0
        %1228 = vmatprep.subr.mxu0 0.0
        %1229 = vmatpush2.xpose.msra.mxu0 0.0
        %1230 = vmatprep.subr.mxu0 0.0
        %1231 = vmatpush2.xpose.msra.mxu0 0.0
        %1232 = vmatprep.subr.mxu0 0.0
        %1233 = vmatpush2.xpose.msra.mxu0 0.0
        %1234 = vmatprep.subr.mxu0 0.0
        %1235 = vmatpush2.xpose.msra.mxu0 0.0
        %1236 = vmatprep.subr.mxu0 0.0
        %1237 = vmatpush2.xpose.msra.mxu0 0.0
        %1238 = vmatprep.subr.mxu0 0.0
        %1239 = vmatpush2.xpose.msra.mxu0 0.0
        %1240 = vmatprep.subr.mxu0 0.0
        %1241 = vmatpush2.xpose.msra.mxu0 0.0
        %1242 = vmatprep.subr.mxu0 0.0
        %1243 = vmatpush2.xpose.msra.mxu0 0.0
        %1244 = vmatprep.subr.mxu0 0.0
        %1245 = vmatpush2.xpose.msra.mxu0 0.0
        %1246 = vmatprep.subr.mxu0 0.0
        %1247 = vmatpush2.xpose.msra.mxu0 0.0
        %1248 = vmatprep.subr.mxu0 0.0
        %1249 = vmatpush2.xpose.msra.mxu0 0.0
        %1250 = vmatprep.mubr.f32.mxu0 0.0
        %1251 = vmatmul.mubr.f32.gmra.mxu0 %v1182
        %v1252 = vpop.f32.mrf.mxu0
        %v1253 = vadd.f32 0.0, %v1252
        %v1254 = vpop.f32.mrf.mxu0
        %1255 = vdwg.mxu0
        %v1256 = vsel %vm1107, %v1087, 0
        %v1258 = vsel %vm1107, %v1094, 0
        %1260 = vmatprep.subr.mxu0 0.0
        %1261 = vmatpush1.xpose.msra.mxu0 0.0
        %1262 = vmatprep.subr.mxu0 0.0
        %1263 = vmatpush1.xpose.msra.mxu0 0.0
        %1264 = vmatprep.subr.mxu0 0.0
        %1265 = vmatpush1.xpose.msra.mxu0 0.0
        %1266 = vmatprep.subr.mxu0 0.0
        %1267 = vmatpush1.xpose.msra.mxu0 0.0
        %1268 = vmatprep.subr.mxu0 0.0
        %1269 = vmatpush1.xpose.msra.mxu0 0.0
        %1270 = vmatprep.subr.mxu0 0.0
        %1271 = vmatpush1.xpose.msra.mxu0 0.0
        %1272 = vmatprep.subr.mxu0 0.0
        %1273 = vmatpush1.xpose.msra.mxu0 0.0
        %1274 = vmatprep.subr.mxu0 0.0
        %1275 = vmatpush1.xpose.msra.mxu0 0.0
        %1276 = vmatprep.subr.mxu0 0.0
        %1277 = vmatpush1.xpose.msra.mxu0 0.0
        %1278 = vmatprep.subr.mxu0 0.0
        %1279 = vmatpush1.xpose.msra.mxu0 0.0
        %1280 = vmatprep.subr.mxu0 0.0
        %1281 = vmatpush1.xpose.msra.mxu0 0.0
        %1282 = vmatprep.subr.mxu0 0.0
        %1283 = vmatpush1.xpose.msra.mxu0 0.0
        %1284 = vmatprep.subr.mxu0 0.0
        %1285 = vmatpush1.xpose.msra.mxu0 0.0
        %1286 = vmatprep.subr.mxu0 0.0
        %1287 = vmatpush1.xpose.msra.mxu0 0.0
        %1288 = vmatprep.subr.mxu0 0.0
        %1289 = vmatpush1.xpose.msra.mxu0 0.0
        %1290 = vmatprep.subr.mxu0 0.0
        %1291 = vmatpush1.xpose.msra.mxu0 %v1258
        %1292 = vmatprep.subr.mxu0 0.0
        %1293 = vmatpush2.xpose.msra.mxu0 0.0
        %1294 = vmatprep.subr.mxu0 0.0
        %1295 = vmatpush2.xpose.msra.mxu0 0.0
        %1296 = vmatprep.subr.mxu0 0.0
        %1297 = vmatpush2.xpose.msra.mxu0 0.0
        %1298 = vmatprep.subr.mxu0 0.0
        %1299 = vmatpush2.xpose.msra.mxu0 0.0
        %1300 = vmatprep.subr.mxu0 0.0
        %1301 = vmatpush2.xpose.msra.mxu0 0.0
        %1302 = vmatprep.subr.mxu0 0.0
        %1303 = vmatpush2.xpose.msra.mxu0 0.0
        %1304 = vmatprep.subr.mxu0 0.0
        %1305 = vmatpush2.xpose.msra.mxu0 0.0
        %1306 = vmatprep.subr.mxu0 0.0
        %1307 = vmatpush2.xpose.msra.mxu0 0.0
        %1308 = vmatprep.subr.mxu0 0.0
        %1309 = vmatpush2.xpose.msra.mxu0 0.0
        %1310 = vmatprep.subr.mxu0 0.0
        %1311 = vmatpush2.xpose.msra.mxu0 0.0
        %1312 = vmatprep.subr.mxu0 0.0
        %1313 = vmatpush2.xpose.msra.mxu0 0.0
        %1314 = vmatprep.subr.mxu0 0.0
        %1315 = vmatpush2.xpose.msra.mxu0 0.0
        %1316 = vmatprep.subr.mxu0 0.0
        %1317 = vmatpush2.xpose.msra.mxu0 0.0
        %1318 = vmatprep.subr.mxu0 0.0
        %1319 = vmatpush2.xpose.msra.mxu0 0.0
        %1320 = vmatprep.subr.mxu0 0.0
        %1321 = vmatpush2.xpose.msra.mxu0 0.0
        %1322 = vmatprep.subr.mxu0 0.0
        %1323 = vmatpush2.xpose.msra.mxu0 0.0
        %1324 = vmatprep.mubr.f32.mxu0 0.0
        %1325 = vmatmul.mubr.f32.gmra.mxu0 %v1256
        %v1326 = vpop.f32.mrf.mxu0
        %v1327 = vadd.f32 0.0, %v1326
        %v1328 = vpop.f32.mrf.mxu0
        %1329 = vdwg.mxu0
        %v1330 = vsel %vm1107, %v1089, 0
        %v1332 = vsel %vm1107, %v1096, 0
        %1334 = vmatprep.subr.mxu0 0.0
        %1335 = vmatpush1.xpose.msra.mxu0 0.0
        %1336 = vmatprep.subr.mxu0 0.0
        %1337 = vmatpush1.xpose.msra.mxu0 0.0
        %1338 = vmatprep.subr.mxu0 0.0
        %1339 = vmatpush1.xpose.msra.mxu0 0.0
        %1340 = vmatprep.subr.mxu0 0.0
        %1341 = vmatpush1.xpose.msra.mxu0 0.0
        %1342 = vmatprep.subr.mxu0 0.0
        %1343 = vmatpush1.xpose.msra.mxu0 0.0
        %1344 = vmatprep.subr.mxu0 0.0
        %1345 = vmatpush1.xpose.msra.mxu0 0.0
        %1346 = vmatprep.subr.mxu0 0.0
        %1347 = vmatpush1.xpose.msra.mxu0 0.0
        %1348 = vmatprep.subr.mxu0 0.0
        %1349 = vmatpush1.xpose.msra.mxu0 0.0
        %1350 = vmatprep.subr.mxu0 0.0
        %1351 = vmatpush1.xpose.msra.mxu0 0.0
        %1352 = vmatprep.subr.mxu0 0.0
        %1353 = vmatpush1.xpose.msra.mxu0 0.0
        %1354 = vmatprep.subr.mxu0 0.0
        %1355 = vmatpush1.xpose.msra.mxu0 0.0
        %1356 = vmatprep.subr.mxu0 0.0
        %1357 = vmatpush1.xpose.msra.mxu0 0.0
        %1358 = vmatprep.subr.mxu0 0.0
        %1359 = vmatpush1.xpose.msra.mxu0 0.0
        %1360 = vmatprep.subr.mxu0 0.0
        %1361 = vmatpush1.xpose.msra.mxu0 0.0
        %1362 = vmatprep.subr.mxu0 0.0
        %1363 = vmatpush1.xpose.msra.mxu0 0.0
        %1364 = vmatprep.subr.mxu0 0.0
        %1365 = vmatpush1.xpose.msra.mxu0 %v1332
        %1366 = vmatprep.subr.mxu0 0.0
        %1367 = vmatpush2.xpose.msra.mxu0 0.0
        %1368 = vmatprep.subr.mxu0 0.0
        %1369 = vmatpush2.xpose.msra.mxu0 0.0
        %1370 = vmatprep.subr.mxu0 0.0
        %1371 = vmatpush2.xpose.msra.mxu0 0.0
        %1372 = vmatprep.subr.mxu0 0.0
        %1373 = vmatpush2.xpose.msra.mxu0 0.0
        %1374 = vmatprep.subr.mxu0 0.0
        %1375 = vmatpush2.xpose.msra.mxu0 0.0
        %1376 = vmatprep.subr.mxu0 0.0
        %1377 = vmatpush2.xpose.msra.mxu0 0.0
        %1378 = vmatprep.subr.mxu0 0.0
        %1379 = vmatpush2.xpose.msra.mxu0 0.0
        %1380 = vmatprep.subr.mxu0 0.0
        %1381 = vmatpush2.xpose.msra.mxu0 0.0
        %1382 = vmatprep.subr.mxu0 0.0
        %1383 = vmatpush2.xpose.msra.mxu0 0.0
        %1384 = vmatprep.subr.mxu0 0.0
        %1385 = vmatpush2.xpose.msra.mxu0 0.0
        %1386 = vmatprep.subr.mxu0 0.0
        %1387 = vmatpush2.xpose.msra.mxu0 0.0
        %1388 = vmatprep.subr.mxu0 0.0
        %1389 = vmatpush2.xpose.msra.mxu0 0.0
        %1390 = vmatprep.subr.mxu0 0.0
        %1391 = vmatpush2.xpose.msra.mxu0 0.0
        %1392 = vmatprep.subr.mxu0 0.0
        %1393 = vmatpush2.xpose.msra.mxu0 0.0
        %1394 = vmatprep.subr.mxu0 0.0
        %1395 = vmatpush2.xpose.msra.mxu0 0.0
        %1396 = vmatprep.subr.mxu0 0.0
        %1397 = vmatpush2.xpose.msra.mxu0 0.0
        %1398 = vmatprep.mubr.f32.mxu0 0.0
        %1399 = vmatmul.mubr.f32.gmra.mxu0 %v1330
        %v1400 = vpop.f32.mrf.mxu0
        %v1401 = vadd.f32 0.0, %v1400
        %v1402 = vpop.f32.mrf.mxu0
        %1403 = vdwg.mxu0
        %v1404 = vlaneseq
        %v1405 = vshrl.u32 %v1404, 7
        %v1406 = vstv %s825
        %v1407 = vadd.s32 %v1405, %v1406
        %v1408 = vlaneseq
        %v1409 = vand.u32 %v1408, 127
        %v1410 = vsub.s32 %v1409, %v1407
        %vm1411 = vcmp.lt.s32.totalorder %v1410, 1
        %v1412 = vsel %vm1411, 1, 0
        %v1413 = vcvt.s32.f32 %v1412
        %vm1414 = vcmp.lt.s32.totalorder %v1410, 0
        %v1415 = vsub.s32 0, %v1410
        %v1416 = vsel %vm1414, %v1415, %v1410
        %v1417 = vcvt.s32.f32 %v1416
        %vm1418 = vcmp.eq.s32.totalorder %v1412, 1
        %v1419 = vsel %vm1418, %v1179, -1e+32
        %v1420 = vsel %vm1418, %v1253, -1e+32
        %v1421 = vsel %vm1418, %v1327, -1e+32
        %v1422 = vsel %vm1418, %v1401, -1e+32
        %v1423 = vsel %vm1107, %v1419, -inf
        %1424 = vmax.xlane.f32.xlu0 %v1423
        %v1425 = vpop.xlane.xlu0 %1424
        %v1426 = vsel %vm1107, %v1420, -inf
        %1427 = vmax.xlane.f32.xlu0 %v1426
        %v1428 = vpop.xlane.xlu0 %1427
        %v1429 = vsel %vm1107, %v1421, -inf
        %1430 = vmax.xlane.f32.xlu0 %v1429
        %v1431 = vpop.xlane.xlu0 %1430
        %v1432 = vsel %vm1107, %v1422, -inf
        %1433 = vmax.xlane.f32.xlu0 %v1432
        %v1434 = vpop.xlane.xlu0 %1433
        %v1435 = vsub.f32 %v1419, %v1425
        %v1436 = vsub.f32 %v1420, %v1428
        %v1437 = vsub.f32 %v1421, %v1431
        %v1438 = vsub.f32 %v1422, %v1434
        %v1439 = vmul.f32 %v1435, 1.442695
        %v1440 = vpow.pop %v1439
        %v1441 = vmul.f32 %v1436, 1.442695
        %v1442 = vpow.pop %v1441
        %v1443 = vmul.f32 %v1437, 1.442695
        %v1444 = vpow.pop %v1443
        %v1445 = vmul.f32 %v1438, 1.442695
        %v1446 = vpow.pop %v1445
        %v1447 = vsel %vm1107, %v1440, 0.0
        %1448 = vadd.xlane.f32.xlu0 %v1447
        %v1449 = vpop.xlane.xlu0 %1448
        %v1450 = vsel %vm1107, %v1442, 0.0
        %1451 = vadd.xlane.f32.xlu0 %v1450
        %v1452 = vpop.xlane.xlu0 %1451
        %v1453 = vsel %vm1107, %v1444, 0.0
        %1454 = vadd.xlane.f32.xlu0 %v1453
        %v1455 = vpop.xlane.xlu0 %1454
        %v1456 = vsel %vm1107, %v1446, 0.0
        %1457 = vadd.xlane.f32.xlu0 %v1456
        %v1458 = vpop.xlane.xlu0 %1457
        %v1459 = vrcp.pop %v1449
        %v1460 = vmul.f32 %v1440, %v1459
        %v1461 = vrcp.pop %v1452
        %v1462 = vmul.f32 %v1442, %v1461
        %v1463 = vrcp.pop %v1455
        %v1464 = vmul.f32 %v1444, %v1463
        %v1465 = vrcp.pop %v1458
        %v1466 = vmul.f32 %v1446, %v1465
        %v1467 = vmul.f32 %v1460, %v1413
        %v1468 = vmul.f32 %v1462, %v1413
        %v1469 = vmul.f32 %v1464, %v1413
        %v1470 = vmul.f32 %v1466, %v1413
        %1475 = vrot.lane.b32.xlu0 %v1467, 127
        %v1476 = vpop.permute.xlu0 %1475
        %1477 = vrot.lane.b32.xlu0 %v1468, 127
        %v1478 = vpop.permute.xlu0 %1477
        %1479 = vrot.lane.b32.xlu0 %v1469, 127
        %v1480 = vpop.permute.xlu0 %1479
        %1481 = vrot.lane.b32.xlu0 %v1470, 127
        %v1482 = vpop.permute.xlu0 %1481
        %vm1487 = vcmask 56320
        %v1488 = vsel %vm1487, %v1476, 0.0
        %v1489 = vsel %vm1487, %v1478, 0.0
        %v1490 = vsel %vm1487, %v1480, 0.0
        %v1491 = vsel %vm1487, %v1482, 0.0
        %v1492 = vadd.f32 %v1467, %v1488
        %v1493 = vadd.f32 %v1468, %v1489
        %v1494 = vadd.f32 %v1469, %v1490
        %v1495 = vadd.f32 %v1470, %v1491
        %1500 = vrot.lane.b32.xlu0 %v1492, 126
        %v1501 = vpop.permute.xlu0 %1500
        %1502 = vrot.lane.b32.xlu0 %v1493, 126
        %v1503 = vpop.permute.xlu0 %1502
        %1504 = vrot.lane.b32.xlu0 %v1494, 126
        %v1505 = vpop.permute.xlu0 %1504
        %1506 = vrot.lane.b32.xlu0 %v1495, 126
        %v1507 = vpop.permute.xlu0 %1506
        %vm1512 = vcmask 48128
        %v1513 = vsel %vm1512, %v1501, 0.0
        %v1514 = vsel %vm1512, %v1503, 0.0
        %v1515 = vsel %vm1512, %v1505, 0.0
        %v1516 = vsel %vm1512, %v1507, 0.0
        %v1517 = vadd.f32 %v1492, %v1513
        %v1518 = vadd.f32 %v1493, %v1514
        %v1519 = vadd.f32 %v1494, %v1515
        %v1520 = vadd.f32 %v1495, %v1516
        %1525 = vrot.lane.b32.xlu0 %v1517, 124
        %v1526 = vpop.permute.xlu0 %1525
        %1527 = vrot.lane.b32.xlu0 %v1518, 124
        %v1528 = vpop.permute.xlu0 %1527
        %1529 = vrot.lane.b32.xlu0 %v1519, 124
        %v1530 = vpop.permute.xlu0 %1529
        %1531 = vrot.lane.b32.xlu0 %v1520, 124
        %v1532 = vpop.permute.xlu0 %1531
        %vm1537 = vcmask 31744
        %v1538 = vsel %vm1537, %v1526, 0.0
        %v1539 = vsel %vm1537, %v1528, 0.0
        %v1540 = vsel %vm1537, %v1530, 0.0
        %v1541 = vsel %vm1537, %v1532, 0.0
        %v1542 = vadd.f32 %v1517, %v1538
        %v1543 = vadd.f32 %v1518, %v1539
        %v1544 = vadd.f32 %v1519, %v1540
        %v1545 = vadd.f32 %v1520, %v1541
        %v1546 = vsub.f32 %v1542, %v1467
        %v1547 = vsub.f32 %v1543, %v1468
        %v1548 = vsub.f32 %v1544, %v1469
        %v1549 = vsub.f32 %v1545, %v1470
        %v1550 = vmul.f32 %v1546, %v1417
        %v1551 = vmul.f32 %v1547, %v1417
        %v1552 = vmul.f32 %v1548, %v1417
        %v1553 = vmul.f32 %v1549, %v1417
        %v1554 = vmax.f32 %v1550, 0.0
        %v1555 = vmax.f32 %v1551, 0.0
        %v1556 = vmax.f32 %v1552, 0.0
        %v1557 = vmax.f32 %v1553, 0.0
        %v1558 = vrsqrt.pop %v1554
        %v1559 = vmul.f32 %v1554, %v1558
        %vm1560 = vcmp.eq.f32.partialorder %v1554, inf
        %v1561 = vsel %vm1560, %v1554, %v1559
        %vm1562 = vcmp.eq.f32.partialorder %v1554, 0.0
        %v1563 = vand.u32 %v1554, 2147483648
        %v1564 = vsel %vm1562, %v1563, %v1561
        %v1565 = vrsqrt.pop %v1555
        %v1566 = vmul.f32 %v1555, %v1565
        %vm1567 = vcmp.eq.f32.partialorder %v1555, inf
        %v1568 = vsel %vm1567, %v1555, %v1566
        %vm1569 = vcmp.eq.f32.partialorder %v1555, 0.0
        %v1570 = vand.u32 %v1555, 2147483648
        %v1571 = vsel %vm1569, %v1570, %v1568
        %v1572 = vrsqrt.pop %v1556
        %v1573 = vmul.f32 %v1556, %v1572
        %vm1574 = vcmp.eq.f32.partialorder %v1556, inf
        %v1575 = vsel %vm1574, %v1556, %v1573
        %vm1576 = vcmp.eq.f32.partialorder %v1556, 0.0
        %v1577 = vand.u32 %v1556, 2147483648
        %v1578 = vsel %vm1576, %v1577, %v1575
        %v1579 = vrsqrt.pop %v1557
        %v1580 = vmul.f32 %v1557, %v1579
        %vm1581 = vcmp.eq.f32.partialorder %v1557, inf
        %v1582 = vsel %vm1581, %v1557, %v1580
        %vm1583 = vcmp.eq.f32.partialorder %v1557, 0.0
        %v1584 = vand.u32 %v1557, 2147483648
        %v1585 = vsel %vm1583, %v1584, %v1582
        %v1586 = vld [vmem:[%s11] sm:$0x1]
        %v1587 = vld [vmem:[%s11 + $0x1] sm:$0x1]
        %v1588 = vld [vmem:[%s11 + $0x2] sm:$0x1]
        %v1589 = vld [vmem:[%s11 + $0x3] sm:$0x1]
        %v1590 = vmul.f32 %v1586, 1.442695
        %v1591 = vpow.pop %v1590
        %v1592 = vmul.f32 %v1587, 1.442695
        %v1593 = vpow.pop %v1592
        %v1594 = vmul.f32 %v1588, 1.442695
        %v1595 = vpow.pop %v1594
        %v1596 = vmul.f32 %v1589, 1.442695
        %v1597 = vpow.pop %v1596
        %v1598 = vadd.f32 %v1591, 1.0
        %v1599 = vadd.f32 %v1593, 1.0
        %v1600 = vadd.f32 %v1595, 1.0
        %v1601 = vadd.f32 %v1597, 1.0
        %v1602 = vlog2.pop %v1598
        %v1603 = vmul.f32 %v1602, 0.6931472
        %v1604 = vlog2.pop %v1599
        %v1605 = vmul.f32 %v1604, 0.6931472
        %v1606 = vlog2.pop %v1600
        %v1607 = vmul.f32 %v1606, 0.6931472
        %v1608 = vlog2.pop %v1601
        %v1609 = vmul.f32 %v1608, 0.6931472
        %v1610 = vsub.f32 0.0, %v1603
        %v1611 = vsub.f32 0.0, %v1605
        %v1612 = vsub.f32 0.0, %v1607
        %v1613 = vsub.f32 0.0, %v1609
        %v1618 = vlaneseq
        %v1619 = vshrl.u32 %v1618, 7
        %v1620 = vsub.s32 0, %v1619
        %v1621 = vrot.slane %v1610, %v1620
        %v1622 = vlaneseq
        %v1623 = vshrl.u32 %v1622, 7
        %v1624 = vsub.s32 0, %v1623
        %v1625 = vrot.slane %v1611, %v1624
        %v1626 = vlaneseq
        %v1627 = vshrl.u32 %v1626, 7
        %v1628 = vsub.s32 0, %v1627
        %v1629 = vrot.slane %v1612, %v1628
        %v1630 = vlaneseq
        %v1631 = vshrl.u32 %v1630, 7
        %v1632 = vsub.s32 0, %v1631
        %v1633 = vrot.slane %v1613, %v1632
        %1634 = vset.pattern.permute.xlu0 0
        %1635 = vperm.xlu0 %1634, %v1621
        %v1636 = vpop.permute.xlu0 %1635
        %1638 = vset.pattern.permute.xlu0 0
        %1639 = vperm.xlu0 %1638, %v1625
        %v1640 = vpop.permute.xlu0 %1639
        %1642 = vset.pattern.permute.xlu0 0
        %1643 = vperm.xlu0 %1642, %v1629
        %v1644 = vpop.permute.xlu0 %1643
        %1646 = vset.pattern.permute.xlu0 0
        %1647 = vperm.xlu0 %1646, %v1633
        %v1648 = vpop.permute.xlu0 %1647
        %v1650 = vmul.f32 %v1564, %v1636
        %v1651 = vmul.f32 %v1571, %v1640
        %v1652 = vmul.f32 %v1578, %v1644
        %v1653 = vmul.f32 %v1585, %v1648
        %v1654 = vmul.f32 %v1650, 1.442695
        %v1655 = vpow.pop %v1654
        %v1656 = vmul.f32 %v1651, 1.442695
        %v1657 = vpow.pop %v1656
        %v1658 = vmul.f32 %v1652, 1.442695
        %v1659 = vpow.pop %v1658
        %v1660 = vmul.f32 %v1653, 1.442695
        %v1661 = vpow.pop %v1660
        %v1662 = vmax.f32 %v1655, 1e-05
        %v1663 = vmax.f32 %v1657, 1e-05
        %v1664 = vmax.f32 %v1659, 1e-05
        %v1665 = vmax.f32 %v1661, 1e-05
        %v1666 = vmin.f32 %v1662, 100000.0
        %v1667 = vmin.f32 %v1663, 100000.0
        %v1668 = vmin.f32 %v1664, 100000.0
        %v1669 = vmin.f32 %v1665, 100000.0
        %v1670 = vmul.f32 %v1179, %v1666
        %v1671 = vmul.f32 %v1253, %v1667
        %v1672 = vmul.f32 %v1327, %v1668
        %v1673 = vmul.f32 %v1401, %v1669
        %v1674 = vsel %vm1418, %v1670, -1e+32
        %v1675 = vsel %vm1418, %v1671, -1e+32
        %v1676 = vsel %vm1418, %v1672, -1e+32
        %v1677 = vsel %vm1418, %v1673, -1e+32
        %v1678 = vsel %vm1107, %v1674, -inf
        %1679 = vmax.xlane.f32.xlu0 %v1678
        %v1680 = vpop.xlane.xlu0 %1679
        %v1681 = vsel %vm1107, %v1675, -inf
        %1682 = vmax.xlane.f32.xlu0 %v1681
        %v1683 = vpop.xlane.xlu0 %1682
        %v1684 = vsel %vm1107, %v1676, -inf
        %1685 = vmax.xlane.f32.xlu0 %v1684
        %v1686 = vpop.xlane.xlu0 %1685
        %v1687 = vsel %vm1107, %v1677, -inf
        %1688 = vmax.xlane.f32.xlu0 %v1687
        %v1689 = vpop.xlane.xlu0 %1688
        %v1690 = vsub.f32 %v1674, %v1680
        %v1691 = vsub.f32 %v1675, %v1683
        %v1692 = vsub.f32 %v1676, %v1686
        %v1693 = vsub.f32 %v1677, %v1689
        %v1694 = vmul.f32 %v1690, 1.442695
        %v1695 = vpow.pop %v1694
        %v1696 = vmul.f32 %v1691, 1.442695
        %v1697 = vpow.pop %v1696
        %v1698 = vmul.f32 %v1692, 1.442695
        %v1699 = vpow.pop %v1698
        %v1700 = vmul.f32 %v1693, 1.442695
        %v1701 = vpow.pop %v1700
        %v1702 = vsel %vm1107, %v1695, 0.0
        %1703 = vadd.xlane.f32.xlu0 %v1702
        %v1704 = vpop.xlane.xlu0 %1703
        %v1705 = vsel %vm1107, %v1697, 0.0
        %1706 = vadd.xlane.f32.xlu0 %v1705
        %v1707 = vpop.xlane.xlu0 %1706
        %v1708 = vsel %vm1107, %v1699, 0.0
        %1709 = vadd.xlane.f32.xlu0 %v1708
        %v1710 = vpop.xlane.xlu0 %1709
        %v1711 = vsel %vm1107, %v1701, 0.0
        %1712 = vadd.xlane.f32.xlu0 %v1711
        %v1713 = vpop.xlane.xlu0 %1712
        %v1714 = vrcp.pop %v1704
        %v1715 = vmul.f32 %v1695, %v1714
        %v1716 = vrcp.pop %v1707
        %v1717 = vmul.f32 %v1697, %v1716
        %v1718 = vrcp.pop %v1710
        %v1719 = vmul.f32 %v1699, %v1718
        %v1720 = vrcp.pop %v1713
        %v1721 = vmul.f32 %v1701, %v1720
        %v1723 = vsel %vm1107, %v1715, 0
        %1725 = vmatprep.subr.mxu0 0.0
        %1726 = vmatpush1.msra.mxu0 0.0
        %1727 = vmatprep.subr.mxu0 0.0
        %1728 = vmatpush1.msra.mxu0 0.0
        %1729 = vmatprep.subr.mxu0 0.0
        %1730 = vmatpush1.msra.mxu0 0.0
        %1731 = vmatprep.subr.mxu0 0.0
        %1732 = vmatpush1.msra.mxu0 0.0
        %1733 = vmatprep.subr.mxu0 0.0
        %1734 = vmatpush1.msra.mxu0 0.0
        %1735 = vmatprep.subr.mxu0 0.0
        %1736 = vmatpush1.msra.mxu0 0.0
        %1737 = vmatprep.subr.mxu0 0.0
        %1738 = vmatpush1.msra.mxu0 0.0
        %1739 = vmatprep.subr.mxu0 0.0
        %1740 = vmatpush1.msra.mxu0 0.0
        %1741 = vmatprep.subr.mxu0 0.0
        %1742 = vmatpush1.msra.mxu0 0.0
        %1743 = vmatprep.subr.mxu0 0.0
        %1744 = vmatpush1.msra.mxu0 0.0
        %1745 = vmatprep.subr.mxu0 0.0
        %1746 = vmatpush1.msra.mxu0 0.0
        %1747 = vmatprep.subr.mxu0 0.0
        %1748 = vmatpush1.msra.mxu0 0.0
        %1749 = vmatprep.subr.mxu0 0.0
        %1750 = vmatpush1.msra.mxu0 0.0
        %1751 = vmatprep.subr.mxu0 0.0
        %1752 = vmatpush1.msra.mxu0 0.0
        %1753 = vmatprep.subr.mxu0 0.0
        %1754 = vmatpush1.msra.mxu0 0.0
        %1755 = vmatprep.subr.mxu0 0.0
        %1756 = vmatpush1.msra.mxu0 %v1079
        %1757 = vmatprep.subr.mxu0 0.0
        %1758 = vmatpush2.msra.mxu0 0.0
        %1759 = vmatprep.subr.mxu0 0.0
        %1760 = vmatpush2.msra.mxu0 0.0
        %1761 = vmatprep.subr.mxu0 0.0
        %1762 = vmatpush2.msra.mxu0 0.0
        %1763 = vmatprep.subr.mxu0 0.0
        %1764 = vmatpush2.msra.mxu0 0.0
        %1765 = vmatprep.subr.mxu0 0.0
        %1766 = vmatpush2.msra.mxu0 0.0
        %1767 = vmatprep.subr.mxu0 0.0
        %1768 = vmatpush2.msra.mxu0 0.0
        %1769 = vmatprep.subr.mxu0 0.0
        %1770 = vmatpush2.msra.mxu0 0.0
        %1771 = vmatprep.subr.mxu0 0.0
        %1772 = vmatpush2.msra.mxu0 0.0
        %1773 = vmatprep.subr.mxu0 0.0
        %1774 = vmatpush2.msra.mxu0 0.0
        %1775 = vmatprep.subr.mxu0 0.0
        %1776 = vmatpush2.msra.mxu0 0.0
        %1777 = vmatprep.subr.mxu0 0.0
        %1778 = vmatpush2.msra.mxu0 0.0
        %1779 = vmatprep.subr.mxu0 0.0
        %1780 = vmatpush2.msra.mxu0 0.0
        %1781 = vmatprep.subr.mxu0 0.0
        %1782 = vmatpush2.msra.mxu0 0.0
        %1783 = vmatprep.subr.mxu0 0.0
        %1784 = vmatpush2.msra.mxu0 0.0
        %1785 = vmatprep.subr.mxu0 0.0
        %1786 = vmatpush2.msra.mxu0 0.0
        %1787 = vmatprep.subr.mxu0 0.0
        %1788 = vmatpush2.msra.mxu0 0.0
        %1789 = vmatprep.mubr.f32.mxu0 0.0
        %1790 = vmatmul.mubr.f32.gmra.mxu0 %v1723
        %v1791 = vpop.f32.mrf.mxu0
        %v1792 = vadd.f32 0.0, %v1791
        %v1793 = vpop.f32.mrf.mxu0
        %1794 = vdwg.mxu0
        %v1796 = vsel %vm1107, %v1717, 0
        %1798 = vmatprep.subr.mxu0 0.0
        %1799 = vmatpush1.msra.mxu0 0.0
        %1800 = vmatprep.subr.mxu0 0.0
        %1801 = vmatpush1.msra.mxu0 0.0
        %1802 = vmatprep.subr.mxu0 0.0
        %1803 = vmatpush1.msra.mxu0 0.0
        %1804 = vmatprep.subr.mxu0 0.0
        %1805 = vmatpush1.msra.mxu0 0.0
        %1806 = vmatprep.subr.mxu0 0.0
        %1807 = vmatpush1.msra.mxu0 0.0
        %1808 = vmatprep.subr.mxu0 0.0
        %1809 = vmatpush1.msra.mxu0 0.0
        %1810 = vmatprep.subr.mxu0 0.0
        %1811 = vmatpush1.msra.mxu0 0.0
        %1812 = vmatprep.subr.mxu0 0.0
        %1813 = vmatpush1.msra.mxu0 0.0
        %1814 = vmatprep.subr.mxu0 0.0
        %1815 = vmatpush1.msra.mxu0 0.0
        %1816 = vmatprep.subr.mxu0 0.0
        %1817 = vmatpush1.msra.mxu0 0.0
        %1818 = vmatprep.subr.mxu0 0.0
        %1819 = vmatpush1.msra.mxu0 0.0
        %1820 = vmatprep.subr.mxu0 0.0
        %1821 = vmatpush1.msra.mxu0 0.0
        %1822 = vmatprep.subr.mxu0 0.0
        %1823 = vmatpush1.msra.mxu0 0.0
        %1824 = vmatprep.subr.mxu0 0.0
        %1825 = vmatpush1.msra.mxu0 0.0
        %1826 = vmatprep.subr.mxu0 0.0
        %1827 = vmatpush1.msra.mxu0 0.0
        %1828 = vmatprep.subr.mxu0 0.0
        %1829 = vmatpush1.msra.mxu0 %v1099
        %1830 = vmatprep.subr.mxu0 0.0
        %1831 = vmatpush2.msra.mxu0 0.0
        %1832 = vmatprep.subr.mxu0 0.0
        %1833 = vmatpush2.msra.mxu0 0.0
        %1834 = vmatprep.subr.mxu0 0.0
        %1835 = vmatpush2.msra.mxu0 0.0
        %1836 = vmatprep.subr.mxu0 0.0
        %1837 = vmatpush2.msra.mxu0 0.0
        %1838 = vmatprep.subr.mxu0 0.0
        %1839 = vmatpush2.msra.mxu0 0.0
        %1840 = vmatprep.subr.mxu0 0.0
        %1841 = vmatpush2.msra.mxu0 0.0
        %1842 = vmatprep.subr.mxu0 0.0
        %1843 = vmatpush2.msra.mxu0 0.0
        %1844 = vmatprep.subr.mxu0 0.0
        %1845 = vmatpush2.msra.mxu0 0.0
        %1846 = vmatprep.subr.mxu0 0.0
        %1847 = vmatpush2.msra.mxu0 0.0
        %1848 = vmatprep.subr.mxu0 0.0
        %1849 = vmatpush2.msra.mxu0 0.0
        %1850 = vmatprep.subr.mxu0 0.0
        %1851 = vmatpush2.msra.mxu0 0.0
        %1852 = vmatprep.subr.mxu0 0.0
        %1853 = vmatpush2.msra.mxu0 0.0
        %1854 = vmatprep.subr.mxu0 0.0
        %1855 = vmatpush2.msra.mxu0 0.0
        %1856 = vmatprep.subr.mxu0 0.0
        %1857 = vmatpush2.msra.mxu0 0.0
        %1858 = vmatprep.subr.mxu0 0.0
        %1859 = vmatpush2.msra.mxu0 0.0
        %1860 = vmatprep.subr.mxu0 0.0
        %1861 = vmatpush2.msra.mxu0 0.0
        %1862 = vmatprep.mubr.f32.mxu0 0.0
        %1863 = vmatmul.mubr.f32.gmra.mxu0 %v1796
        %v1864 = vpop.f32.mrf.mxu0
        %v1865 = vadd.f32 0.0, %v1864
        %v1866 = vpop.f32.mrf.mxu0
        %1867 = vdwg.mxu0
        %v1869 = vsel %vm1107, %v1719, 0
        %1871 = vmatprep.subr.mxu0 0.0
        %1872 = vmatpush1.msra.mxu0 0.0
        %1873 = vmatprep.subr.mxu0 0.0
        %1874 = vmatpush1.msra.mxu0 0.0
        %1875 = vmatprep.subr.mxu0 0.0
        %1876 = vmatpush1.msra.mxu0 0.0
        %1877 = vmatprep.subr.mxu0 0.0
        %1878 = vmatpush1.msra.mxu0 0.0
        %1879 = vmatprep.subr.mxu0 0.0
        %1880 = vmatpush1.msra.mxu0 0.0
        %1881 = vmatprep.subr.mxu0 0.0
        %1882 = vmatpush1.msra.mxu0 0.0
        %1883 = vmatprep.subr.mxu0 0.0
        %1884 = vmatpush1.msra.mxu0 0.0
        %1885 = vmatprep.subr.mxu0 0.0
        %1886 = vmatpush1.msra.mxu0 0.0
        %1887 = vmatprep.subr.mxu0 0.0
        %1888 = vmatpush1.msra.mxu0 0.0
        %1889 = vmatprep.subr.mxu0 0.0
        %1890 = vmatpush1.msra.mxu0 0.0
        %1891 = vmatprep.subr.mxu0 0.0
        %1892 = vmatpush1.msra.mxu0 0.0
        %1893 = vmatprep.subr.mxu0 0.0
        %1894 = vmatpush1.msra.mxu0 0.0
        %1895 = vmatprep.subr.mxu0 0.0
        %1896 = vmatpush1.msra.mxu0 0.0
        %1897 = vmatprep.subr.mxu0 0.0
        %1898 = vmatpush1.msra.mxu0 0.0
        %1899 = vmatprep.subr.mxu0 0.0
        %1900 = vmatpush1.msra.mxu0 0.0
        %1901 = vmatprep.subr.mxu0 0.0
        %1902 = vmatpush1.msra.mxu0 %v1102
        %1903 = vmatprep.subr.mxu0 0.0
        %1904 = vmatpush2.msra.mxu0 0.0
        %1905 = vmatprep.subr.mxu0 0.0
        %1906 = vmatpush2.msra.mxu0 0.0
        %1907 = vmatprep.subr.mxu0 0.0
        %1908 = vmatpush2.msra.mxu0 0.0
        %1909 = vmatprep.subr.mxu0 0.0
        %1910 = vmatpush2.msra.mxu0 0.0
        %1911 = vmatprep.subr.mxu0 0.0
        %1912 = vmatpush2.msra.mxu0 0.0
        %1913 = vmatprep.subr.mxu0 0.0
        %1914 = vmatpush2.msra.mxu0 0.0
        %1915 = vmatprep.subr.mxu0 0.0
        %1916 = vmatpush2.msra.mxu0 0.0
        %1917 = vmatprep.subr.mxu0 0.0
        %1918 = vmatpush2.msra.mxu0 0.0
        %1919 = vmatprep.subr.mxu0 0.0
        %1920 = vmatpush2.msra.mxu0 0.0
        %1921 = vmatprep.subr.mxu0 0.0
        %1922 = vmatpush2.msra.mxu0 0.0
        %1923 = vmatprep.subr.mxu0 0.0
        %1924 = vmatpush2.msra.mxu0 0.0
        %1925 = vmatprep.subr.mxu0 0.0
        %1926 = vmatpush2.msra.mxu0 0.0
        %1927 = vmatprep.subr.mxu0 0.0
        %1928 = vmatpush2.msra.mxu0 0.0
        %1929 = vmatprep.subr.mxu0 0.0
        %1930 = vmatpush2.msra.mxu0 0.0
        %1931 = vmatprep.subr.mxu0 0.0
        %1932 = vmatpush2.msra.mxu0 0.0
        %1933 = vmatprep.subr.mxu0 0.0
        %1934 = vmatpush2.msra.mxu0 0.0
        %1935 = vmatprep.mubr.f32.mxu0 0.0
        %1936 = vmatmul.mubr.f32.gmra.mxu0 %v1869
        %v1937 = vpop.f32.mrf.mxu0
        %v1938 = vadd.f32 0.0, %v1937
        %v1939 = vpop.f32.mrf.mxu0
        %1940 = vdwg.mxu0
        %v1942 = vsel %vm1107, %v1721, 0
        %1944 = vmatprep.subr.mxu0 0.0
        %1945 = vmatpush1.msra.mxu0 0.0
        %1946 = vmatprep.subr.mxu0 0.0
        %1947 = vmatpush1.msra.mxu0 0.0
        %1948 = vmatprep.subr.mxu0 0.0
        %1949 = vmatpush1.msra.mxu0 0.0
        %1950 = vmatprep.subr.mxu0 0.0
        %1951 = vmatpush1.msra.mxu0 0.0
        %1952 = vmatprep.subr.mxu0 0.0
        %1953 = vmatpush1.msra.mxu0 0.0
        %1954 = vmatprep.subr.mxu0 0.0
        %1955 = vmatpush1.msra.mxu0 0.0
        %1956 = vmatprep.subr.mxu0 0.0
        %1957 = vmatpush1.msra.mxu0 0.0
        %1958 = vmatprep.subr.mxu0 0.0
        %1959 = vmatpush1.msra.mxu0 0.0
        %1960 = vmatprep.subr.mxu0 0.0
        %1961 = vmatpush1.msra.mxu0 0.0
        %1962 = vmatprep.subr.mxu0 0.0
        %1963 = vmatpush1.msra.mxu0 0.0
        %1964 = vmatprep.subr.mxu0 0.0
        %1965 = vmatpush1.msra.mxu0 0.0
        %1966 = vmatprep.subr.mxu0 0.0
        %1967 = vmatpush1.msra.mxu0 0.0
        %1968 = vmatprep.subr.mxu0 0.0
        %1969 = vmatpush1.msra.mxu0 0.0
        %1970 = vmatprep.subr.mxu0 0.0
        %1971 = vmatpush1.msra.mxu0 0.0
        %1972 = vmatprep.subr.mxu0 0.0
        %1973 = vmatpush1.msra.mxu0 0.0
        %1974 = vmatprep.subr.mxu0 0.0
        %1975 = vmatpush1.msra.mxu0 %v1105
        %1976 = vmatprep.subr.mxu0 0.0
        %1977 = vmatpush2.msra.mxu0 0.0
        %1978 = vmatprep.subr.mxu0 0.0
        %1979 = vmatpush2.msra.mxu0 0.0
        %1980 = vmatprep.subr.mxu0 0.0
        %1981 = vmatpush2.msra.mxu0 0.0
        %1982 = vmatprep.subr.mxu0 0.0
        %1983 = vmatpush2.msra.mxu0 0.0
        %1984 = vmatprep.subr.mxu0 0.0
        %1985 = vmatpush2.msra.mxu0 0.0
        %1986 = vmatprep.subr.mxu0 0.0
        %1987 = vmatpush2.msra.mxu0 0.0
        %1988 = vmatprep.subr.mxu0 0.0
        %1989 = vmatpush2.msra.mxu0 0.0
        %1990 = vmatprep.subr.mxu0 0.0
        %1991 = vmatpush2.msra.mxu0 0.0
        %1992 = vmatprep.subr.mxu0 0.0
        %1993 = vmatpush2.msra.mxu0 0.0
        %1994 = vmatprep.subr.mxu0 0.0
        %1995 = vmatpush2.msra.mxu0 0.0
        %1996 = vmatprep.subr.mxu0 0.0
        %1997 = vmatpush2.msra.mxu0 0.0
        %1998 = vmatprep.subr.mxu0 0.0
        %1999 = vmatpush2.msra.mxu0 0.0
        %2000 = vmatprep.subr.mxu0 0.0
        %2001 = vmatpush2.msra.mxu0 0.0
        %2002 = vmatprep.subr.mxu0 0.0
        %2003 = vmatpush2.msra.mxu0 0.0
        %2004 = vmatprep.subr.mxu0 0.0
        %2005 = vmatpush2.msra.mxu0 0.0
        %2006 = vmatprep.subr.mxu0 0.0
        %2007 = vmatpush2.msra.mxu0 0.0
        %2008 = vmatprep.mubr.f32.mxu0 0.0
        %2009 = vmatmul.mubr.f32.gmra.mxu0 %v1942
        %v2010 = vpop.f32.mrf.mxu0
        %v2011 = vadd.f32 0.0, %v2010
        %v2012 = vpop.f32.mrf.mxu0
        %2013 = vdwg.mxu0
        %2015 = vrot.lane.b32.xlu0 %v1865, 8
        %v2016 = vpop.permute.xlu0 %2015
        %2019 = vrot.lane.b32.xlu0 %v1938, 16
        %v2020 = vpop.permute.xlu0 %2019
        %2023 = vrot.lane.b32.xlu0 %v2011, 24
        %v2024 = vpop.permute.xlu0 %2023
        %v2026 = vsel %vm1107, %v1792, %v2016
        %vm2027 = vcmask 130048
        %v2028 = vsel %vm2027, %v2026, %v2020
        %vm2029 = vcmask 195584
        %v2030 = vsel %vm2029, %v2028, %v2024
        %v2031 = vld [vmem:[#allocation10] sm:$0xff]
        %v2032 = vld [vmem:[#allocation10 + $0x8] sm:$0xff]
        %v2033 = vld [vmem:[#allocation10 + $0x10] sm:$0xff]
        %v2034 = vld [vmem:[#allocation10 + $0x18] sm:$0xff]
        %v2035 = vld [vmem:[#allocation11] sm:$0x1]
        %v2037 = vlaneseq
        %v2038 = vshrl.u32 %v2037, 7
        %v2039 = vsub.s32 0, %v2038
        %v2040 = vrot.slane %v2035, %v2039
        %v2043 = vsel %vm840, %v2030, 0
        %2045 = vmatprep.subr.mxu0 0.0
        %2046 = vmatpush1.msra.mxu0 0.0
        %2047 = vmatprep.subr.mxu0 0.0
        %2048 = vmatpush1.msra.mxu0 0.0
        %2049 = vmatprep.subr.mxu0 0.0
        %2050 = vmatpush1.msra.mxu0 0.0
        %2051 = vmatprep.subr.mxu0 0.0
        %2052 = vmatpush1.msra.mxu0 0.0
        %2053 = vmatprep.subr.mxu0 0.0
        %2054 = vmatpush1.msra.mxu0 0.0
        %2055 = vmatprep.subr.mxu0 0.0
        %2056 = vmatpush1.msra.mxu0 0.0
        %2057 = vmatprep.subr.mxu0 0.0
        %2058 = vmatpush1.msra.mxu0 0.0
        %2059 = vmatprep.subr.mxu0 0.0
        %2060 = vmatpush1.msra.mxu0 0.0
        %2061 = vmatprep.subr.mxu0 0.0
        %2062 = vmatpush1.msra.mxu0 0.0
        %2063 = vmatprep.subr.mxu0 0.0
        %2064 = vmatpush1.msra.mxu0 0.0
        %2065 = vmatprep.subr.mxu0 0.0
        %2066 = vmatpush1.msra.mxu0 0.0
        %2067 = vmatprep.subr.mxu0 0.0
        %2068 = vmatpush1.msra.mxu0 0.0
        %2069 = vmatprep.subr.mxu0 0.0
        %2070 = vmatpush1.msra.mxu0 %v2034
        %2071 = vmatprep.subr.mxu0 0.0
        %2072 = vmatpush1.msra.mxu0 %v2033
        %2073 = vmatprep.subr.mxu0 0.0
        %2074 = vmatpush1.msra.mxu0 %v2032
        %2075 = vmatprep.subr.mxu0 0.0
        %2076 = vmatpush1.msra.mxu0 %v2031
        %2077 = vmatprep.subr.mxu0 0.0
        %2078 = vmatpush2.msra.mxu0 0.0
        %2079 = vmatprep.subr.mxu0 0.0
        %2080 = vmatpush2.msra.mxu0 0.0
        %2081 = vmatprep.subr.mxu0 0.0
        %2082 = vmatpush2.msra.mxu0 0.0
        %2083 = vmatprep.subr.mxu0 0.0
        %2084 = vmatpush2.msra.mxu0 0.0
        %2085 = vmatprep.subr.mxu0 0.0
        %2086 = vmatpush2.msra.mxu0 0.0
        %2087 = vmatprep.subr.mxu0 0.0
        %2088 = vmatpush2.msra.mxu0 0.0
        %2089 = vmatprep.subr.mxu0 0.0
        %2090 = vmatpush2.msra.mxu0 0.0
        %2091 = vmatprep.subr.mxu0 0.0
        %2092 = vmatpush2.msra.mxu0 0.0
        %2093 = vmatprep.subr.mxu0 0.0
        %2094 = vmatpush2.msra.mxu0 0.0
        %2095 = vmatprep.subr.mxu0 0.0
        %2096 = vmatpush2.msra.mxu0 0.0
        %2097 = vmatprep.subr.mxu0 0.0
        %2098 = vmatpush2.msra.mxu0 0.0
        %2099 = vmatprep.subr.mxu0 0.0
        %2100 = vmatpush2.msra.mxu0 0.0
        %2101 = vmatprep.subr.mxu0 0.0
        %2102 = vmatpush2.msra.mxu0 0.0
        %2103 = vmatprep.subr.mxu0 0.0
        %2104 = vmatpush2.msra.mxu0 0.0
        %2105 = vmatprep.subr.mxu0 0.0
        %2106 = vmatpush2.msra.mxu0 0.0
        %2107 = vmatprep.subr.mxu0 0.0
        %2108 = vmatpush2.msra.mxu0 0.0
        %2109 = vmatprep.mubr.f32.mxu0 0.0
        %2110 = vmatmul.mubr.f32.gmra.mxu0 %v2043
        %v2111 = vpop.f32.mrf.mxu0
        %v2112 = vadd.f32 %v2040, %v2111
        %v2113 = vpop.f32.mrf.mxu0
        %2114 = vdwg.mxu0
        %v2115 = vadd.f32 %v826, %v2112
        %v2116 = vld [vmem:[#allocation13] sm:$0x1]
        %v2117 = vld [vmem:[#allocation14] sm:$0x1]
        %v2118 = vsel %vm840, %v2115, 0.0
        %2119 = vadd.xlane.f32.xlu0 %v2118
        %v2120 = vpop.xlane.xlu0 %2119
        %v2121 = vrcp.pop 32.0
        %v2122 = vmul.f32 %v2120, %v2121
        %v2123 = vsub.f32 %v2115, %v2122
        %v2124 = vmul.f32 %v2123, %v2123
        %v2125 = vsel %vm840, %v2124, 0.0
        %2126 = vadd.xlane.f32.xlu0 %v2125
        %v2127 = vpop.xlane.xlu0 %2126
        %v2128 = vmul.f32 %v2127, %v2121
        %v2129 = vadd.f32 %v2128, 1e-05
        %v2130 = vrsqrt.pop %v2129
        %v2131 = vmul.f32 %v2123, %v2130
        %v2133 = vlaneseq
        %v2134 = vshrl.u32 %v2133, 7
        %v2135 = vsub.s32 0, %v2134
        %v2136 = vrot.slane %v2116, %v2135
        %v2138 = vmul.f32 %v2131, %v2136
        %v2140 = vlaneseq
        %v2141 = vshrl.u32 %v2140, 7
        %v2142 = vsub.s32 0, %v2141
        %v2143 = vrot.slane %v2117, %v2142
        %v2145 = vadd.f32 %v2138, %v2143
        %v2146 = vld [vmem:[#allocation16] sm:$0xff]
        %v2147 = vld [vmem:[#allocation16 + $0x8] sm:$0xff]
        %v2148 = vld [vmem:[#allocation16 + $0x10] sm:$0xff]
        %v2149 = vld [vmem:[#allocation16 + $0x18] sm:$0xff]
        %v2150 = vld [vmem:[#allocation17] sm:$0x1]
        %v2152 = vlaneseq
        %v2153 = vshrl.u32 %v2152, 7
        %v2154 = vsub.s32 0, %v2153
        %v2155 = vrot.slane %v2150, %v2154
        %v2158 = vsel %vm840, %v2145, 0
        %2160 = vmatprep.subr.mxu0 0.0
        %2161 = vmatpush1.msra.mxu0 0.0
        %2162 = vmatprep.subr.mxu0 0.0
        %2163 = vmatpush1.msra.mxu0 0.0
        %2164 = vmatprep.subr.mxu0 0.0
        %2165 = vmatpush1.msra.mxu0 0.0
        %2166 = vmatprep.subr.mxu0 0.0
        %2167 = vmatpush1.msra.mxu0 0.0
        %2168 = vmatprep.subr.mxu0 0.0
        %2169 = vmatpush1.msra.mxu0 0.0
        %2170 = vmatprep.subr.mxu0 0.0
        %2171 = vmatpush1.msra.mxu0 0.0
        %2172 = vmatprep.subr.mxu0 0.0
        %2173 = vmatpush1.msra.mxu0 0.0
        %2174 = vmatprep.subr.mxu0 0.0
        %2175 = vmatpush1.msra.mxu0 0.0
        %2176 = vmatprep.subr.mxu0 0.0
        %2177 = vmatpush1.msra.mxu0 0.0
        %2178 = vmatprep.subr.mxu0 0.0
        %2179 = vmatpush1.msra.mxu0 0.0
        %2180 = vmatprep.subr.mxu0 0.0
        %2181 = vmatpush1.msra.mxu0 0.0
        %2182 = vmatprep.subr.mxu0 0.0
        %2183 = vmatpush1.msra.mxu0 0.0
        %2184 = vmatprep.subr.mxu0 0.0
        %2185 = vmatpush1.msra.mxu0 %v2149
        %2186 = vmatprep.subr.mxu0 0.0
        %2187 = vmatpush1.msra.mxu0 %v2148
        %2188 = vmatprep.subr.mxu0 0.0
        %2189 = vmatpush1.msra.mxu0 %v2147
        %2190 = vmatprep.subr.mxu0 0.0
        %2191 = vmatpush1.msra.mxu0 %v2146
        %2192 = vmatprep.subr.mxu0 0.0
        %2193 = vmatpush2.msra.mxu0 0.0
        %2194 = vmatprep.subr.mxu0 0.0
        %2195 = vmatpush2.msra.mxu0 0.0
        %2196 = vmatprep.subr.mxu0 0.0
        %2197 = vmatpush2.msra.mxu0 0.0
        %2198 = vmatprep.subr.mxu0 0.0
        %2199 = vmatpush2.msra.mxu0 0.0
        %2200 = vmatprep.subr.mxu0 0.0
        %2201 = vmatpush2.msra.mxu0 0.0
        %2202 = vmatprep.subr.mxu0 0.0
        %2203 = vmatpush2.msra.mxu0 0.0
        %2204 = vmatprep.subr.mxu0 0.0
        %2205 = vmatpush2.msra.mxu0 0.0
        %2206 = vmatprep.subr.mxu0 0.0
        %2207 = vmatpush2.msra.mxu0 0.0
        %2208 = vmatprep.subr.mxu0 0.0
        %2209 = vmatpush2.msra.mxu0 0.0
        %2210 = vmatprep.subr.mxu0 0.0
        %2211 = vmatpush2.msra.mxu0 0.0
        %2212 = vmatprep.subr.mxu0 0.0
        %2213 = vmatpush2.msra.mxu0 0.0
        %2214 = vmatprep.subr.mxu0 0.0
        %2215 = vmatpush2.msra.mxu0 0.0
        %2216 = vmatprep.subr.mxu0 0.0
        %2217 = vmatpush2.msra.mxu0 0.0
        %2218 = vmatprep.subr.mxu0 0.0
        %2219 = vmatpush2.msra.mxu0 0.0
        %2220 = vmatprep.subr.mxu0 0.0
        %2221 = vmatpush2.msra.mxu0 0.0
        %2222 = vmatprep.subr.mxu0 0.0
        %2223 = vmatpush2.msra.mxu0 0.0
        %2224 = vmatprep.mubr.f32.mxu0 0.0
        %2225 = vmatmul.mubr.f32.gmra.mxu0 %v2158
        %v2226 = vpop.f32.mrf.mxu0
        %v2227 = vadd.f32 %v2155, %v2226
        %v2228 = vpop.f32.mrf.mxu0
        %2229 = vdwg.mxu0
        %v2230 = vmax.f32 %v2227, 0.0
        %v2231 = vld [vmem:[%s16] sm:$0xff]
        %v2232 = vld [vmem:[%s16 + $0x8] sm:$0xff]
        %v2233 = vld [vmem:[%s16 + $0x10] sm:$0xff]
        %v2234 = vld [vmem:[%s16 + $0x18] sm:$0xff]
        %v2235 = vld [vmem:[%s16 + $0x20] sm:$0xff]
        %v2236 = vld [vmem:[%s16 + $0x28] sm:$0xff]
        %v2237 = vld [vmem:[%s16 + $0x30] sm:$0xff]
        %v2238 = vld [vmem:[%s16 + $0x38] sm:$0xff]
        %v2239 = vld [vmem:[%s17] sm:$0x1]
        %v2241 = vlaneseq
        %v2242 = vshrl.u32 %v2241, 7
        %v2243 = vsub.s32 0, %v2242
        %v2244 = vrot.slane %v2239, %v2243
        %vm2246 = vcmask 523264
        %v2248 = vsel %vm2246, %v2230, 0
        %2250 = vmatprep.subr.mxu0 0.0
        %2251 = vmatpush1.msra.mxu0 0.0
        %2252 = vmatprep.subr.mxu0 0.0
        %2253 = vmatpush1.msra.mxu0 0.0
        %2254 = vmatprep.subr.mxu0 0.0
        %2255 = vmatpush1.msra.mxu0 0.0
        %2256 = vmatprep.subr.mxu0 0.0
        %2257 = vmatpush1.msra.mxu0 0.0
        %2258 = vmatprep.subr.mxu0 0.0
        %2259 = vmatpush1.msra.mxu0 0.0
        %2260 = vmatprep.subr.mxu0 0.0
        %2261 = vmatpush1.msra.mxu0 0.0
        %2262 = vmatprep.subr.mxu0 0.0
        %2263 = vmatpush1.msra.mxu0 0.0
        %2264 = vmatprep.subr.mxu0 0.0
        %2265 = vmatpush1.msra.mxu0 0.0
        %2266 = vmatprep.subr.mxu0 0.0
        %2267 = vmatpush1.msra.mxu0 %v2238
        %2268 = vmatprep.subr.mxu0 0.0
        %2269 = vmatpush1.msra.mxu0 %v2237
        %2270 = vmatprep.subr.mxu0 0.0
        %2271 = vmatpush1.msra.mxu0 %v2236
        %2272 = vmatprep.subr.mxu0 0.0
        %2273 = vmatpush1.msra.mxu0 %v2235
        %2274 = vmatprep.subr.mxu0 0.0
        %2275 = vmatpush1.msra.mxu0 %v2234
        %2276 = vmatprep.subr.mxu0 0.0
        %2277 = vmatpush1.msra.mxu0 %v2233
        %2278 = vmatprep.subr.mxu0 0.0
        %2279 = vmatpush1.msra.mxu0 %v2232
        %2280 = vmatprep.subr.mxu0 0.0
        %2281 = vmatpush1.msra.mxu0 %v2231
        %2282 = vmatprep.subr.mxu0 0.0
        %2283 = vmatpush2.msra.mxu0 0.0
        %2284 = vmatprep.subr.mxu0 0.0
        %2285 = vmatpush2.msra.mxu0 0.0
        %2286 = vmatprep.subr.mxu0 0.0
        %2287 = vmatpush2.msra.mxu0 0.0
        %2288 = vmatprep.subr.mxu0 0.0
        %2289 = vmatpush2.msra.mxu0 0.0
        %2290 = vmatprep.subr.mxu0 0.0
        %2291 = vmatpush2.msra.mxu0 0.0
        %2292 = vmatprep.subr.mxu0 0.0
        %2293 = vmatpush2.msra.mxu0 0.0
        %2294 = vmatprep.subr.mxu0 0.0
        %2295 = vmatpush2.msra.mxu0 0.0
        %2296 = vmatprep.subr.mxu0 0.0
        %2297 = vmatpush2.msra.mxu0 0.0
        %2298 = vmatprep.subr.mxu0 0.0
        %2299 = vmatpush2.msra.mxu0 0.0
        %2300 = vmatprep.subr.mxu0 0.0
        %2301 = vmatpush2.msra.mxu0 0.0
        %2302 = vmatprep.subr.mxu0 0.0
        %2303 = vmatpush2.msra.mxu0 0.0
        %2304 = vmatprep.subr.mxu0 0.0
        %2305 = vmatpush2.msra.mxu0 0.0
        %2306 = vmatprep.subr.mxu0 0.0
        %2307 = vmatpush2.msra.mxu0 0.0
        %2308 = vmatprep.subr.mxu0 0.0
        %2309 = vmatpush2.msra.mxu0 0.0
        %2310 = vmatprep.subr.mxu0 0.0
        %2311 = vmatpush2.msra.mxu0 0.0
        %2312 = vmatprep.subr.mxu0 0.0
        %2313 = vmatpush2.msra.mxu0 0.0
        %2314 = vmatprep.mubr.f32.mxu0 0.0
        %2315 = vmatmul.mubr.f32.gmra.mxu0 %v2248
        %v2316 = vpop.f32.mrf.mxu0
        %v2317 = vadd.f32 %v2244, %v2316
        %v2318 = vpop.f32.mrf.mxu0
        %2319 = vdwg.mxu0
        %v2320 = vadd.f32 %v2145, %v2317
        %v2321 = vld [vmem:[%s18] sm:$0x1]
        %v2322 = vld [vmem:[%s19] sm:$0x1]
        %v2323 = vsel %vm840, %v2320, 0.0
        %2324 = vadd.xlane.f32.xlu0 %v2323
        %v2325 = vpop.xlane.xlu0 %2324
        %v2326 = vmul.f32 %v2325, %v2121
        %v2327 = vsub.f32 %v2320, %v2326
        %v2328 = vmul.f32 %v2327, %v2327
        %v2329 = vsel %vm840, %v2328, 0.0
        %2330 = vadd.xlane.f32.xlu0 %v2329
        %v2331 = vpop.xlane.xlu0 %2330
        %v2332 = vmul.f32 %v2331, %v2121
        %v2333 = vadd.f32 %v2332, 1e-05
        %v2334 = vrsqrt.pop %v2333
        %v2335 = vmul.f32 %v2327, %v2334
        %v2337 = vlaneseq
        %v2338 = vshrl.u32 %v2337, 7
        %v2339 = vsub.s32 0, %v2338
        %v2340 = vrot.slane %v2321, %v2339
        %v2342 = vmul.f32 %v2335, %v2340
        %v2344 = vlaneseq
        %v2345 = vshrl.u32 %v2344, 7
        %v2346 = vsub.s32 0, %v2345
        %v2347 = vrot.slane %v2322, %v2346
        %v2349 = vadd.f32 %v2342, %v2347
        %2350 = vst.msk [vmem:[%s824] sm:$0xff] %vm840, %v2349
        %s2351 = sand.u32 %s503, 1
        %s2352 = scalar_lea.sflag [#allocation4], %s2351
        %s2353 = sand.u32 %s503, 1
        %s2354 = smul.addr %s2353, 8
        %s2355 = scalar_lea.vmem [#allocation19], %s2354
        // Predicated region
        $region141: #{tpu_custom_call.1} parent=99 // pred_check
          %p2356 = pneg %p513
        $region142: #{tpu_custom_call.1} parent=99 // pred_check_branch
          %2358 = sbr.rel (%p2356) target = $region144
        $region143: #{tpu_custom_call.1} parent=99 // pred_region
          %s2360 = ssub.s32 128, 128
          %2361 = vsyncadd %s2352, %s2360
          %s2362 = sadd.s32 %s49, %s48
          %s2363 = smul.addr %s2362, 128
          %s2364 = scalar_lea.hbm %s20, %s2363
          %s2366 = sshll.u32 %s2355, 4
          %s2367 = int_to_ptr.vmem [resolvable:$true] %s2366
          %2369 = dma.vmem_to_hbm [thread:$0]  %s2367, 128, %s2364, %s2352
        $region144: #{tpu_custom_call.1} parent=99 // pred_fallthru
          _
      $region100: #{tpu_custom_call.1} parent=5 // pred_fallthru
        _
      %p2370 = scmp.le.s32.totalorder 2, %s39
      // Predicated region
      $region145: #{tpu_custom_call.1} parent=5 // pred_check
        %p2371 = pneg %p2370
      $region146: #{tpu_custom_call.1} parent=5 // pred_check_branch
        %2373 = sbr.rel (%p2371) target = $region148
      $region147: #{tpu_custom_call.1} parent=5 // pred_region
        %s2374 = ssub.s32 %s39, 2
        // Predicated region
        $region149: #{tpu_custom_call.1} parent=147 // pred_check
          %p2375 = pneg %p519
        $region150: #{tpu_custom_call.1} parent=147 // pred_check_branch
          %2377 = sbr.rel (%p2375) target = $region152
        $region151: #{tpu_custom_call.1} parent=147 // pred_region
          %s2378 = sand.u32 %s504, 1
          %s2379 = scalar_lea.sflag [#allocation4], %s2378
          %s2380 = sand.u32 %s504, 1
          %s2381 = smul.addr %s2380, 8
          %s2382 = scalar_lea.vmem [#allocation19], %s2381
          %2383 = dma.done %s2379, 128
        $region152: #{tpu_custom_call.1} parent=147 // pred_fallthru
          _
      $region148: #{tpu_custom_call.1} parent=5 // pred_fallthru
        _
    $region6: #{tpu_custom_call.1} parent=1 // loop_footer
      %s43 = sadd.s32 1, %s39
    $region7: #{tpu_custom_call.1} parent=1 // loop_footer_branch
      %38 = sbr.rel target = $region3
    $region8: #{tpu_custom_call.1} parent=1 // loop_exit
      _
    %2384 = vsyncpa [#allocation3], 1
    %s2385 = scalar_lea.sflag [#allocation3], 1
    %2386 = vsyncpa %s2385, 1
    %2387 = vsyncpa [#allocation6], 1
    %s2388 = scalar_lea.sflag [#allocation6], 1
    %2389 = vsyncpa %s2388, 1
    %2390 = vsyncpa [#allocation9], 1
    %2391 = vsyncpa [#allocation12], 1
    %2392 = vsyncpa [#allocation15], 1
    %2393 = vsyncpa [#allocation18], 1
    %2394 = vsyncpa [#allocation4], 1
    %s2395 = scalar_lea.sflag [#allocation4], 1
    %2396 = vsyncpa %s2395, 1

</llo_original>
